<compile_context>
chip_gen: v6e
topology: v6e:2x2x1
jax: 0.10.0
libtpu: 0.0.40
codegen_flags: <defaults>
</compile_context>

<pallas_src>
import jax
import jax.numpy as jnp
from jax.experimental import pallas as pl
from jax.experimental.pallas import tpu as pltpu

LANE = 128


def _round_up(n, m):
    return ((n + m - 1) // m) * m


def vae_kernel(x_ref, eps_ref,
               w0_ref, b0_ref,
               whead_ref, bhead_ref,
               wg0_ref, bg0_ref,
               wg1_ref, bg1_ref,
               out_ref):
    """One batch tile of the full VAE forward.

    x_ref:   (tile_b, d)      f32, unpadded feature width
    eps_ref: (tile_b, dz)     bf16, unpadded latent width
    out_ref: (tile_b, 3*128)  bf16 packed [recon_pad | mu_pad | logvar_pad]
    Matmul operands are bf16 (MXU native); accumulation / VPU / EUP math f32.
    """
    d_pad = wg1_ref.shape[1]           # padded reconstruction width (128)
    z_pad = whead_ref.shape[1] // 2    # padded latent width (128)
    dz = eps_ref.shape[1]              # real latent width (16)

    x = x_ref[...].astype(jnp.bfloat16)             # (tile_b, d), K = d in matmul

    # --- encoder: h = relu(x @ W0 + b0) ---
    h = jnp.dot(x, w0_ref[...], preferred_element_type=jnp.float32) + b0_ref[...]
    h = jnp.maximum(h, 0.0)

    # --- fused mu/logvar head: one matmul, lane-aligned 128|128 split ---
    head = jnp.dot(h.astype(jnp.bfloat16), whead_ref[...],
                   preferred_element_type=jnp.float32) + bhead_ref[...]

    # Early, 128-aligned, unmasked store of mu|logvar: ends head's live range
    # before the decoder matmuls (reduces vreg pressure / spills).
    out_ref[:, d_pad:] = head.astype(out_ref.dtype)

    # --- reparameterize at the real latent width (training mode) ---
    mu = head[:, :dz]
    logvar = head[:, z_pad:z_pad + dz]
    z = mu + eps_ref[...].astype(jnp.float32) * jnp.exp(0.5 * logvar)

    # --- decoder: relu(z @ Wg0 + bg0) then final linear (no relu on last) ---
    g = jnp.dot(z.astype(jnp.bfloat16), wg0_ref[...],
                preferred_element_type=jnp.float32) + bg0_ref[...]
    g = jnp.maximum(g, 0.0)
    recon = jnp.dot(g.astype(jnp.bfloat16), wg1_ref[...],
                    preferred_element_type=jnp.float32) + bg1_ref[...]

    out_ref[:, :d_pad] = recon.astype(out_ref.dtype)


def vae_forward(x, eps, params, *, tile_b=512, single_buffer_weights=True):
    """Fused VAE forward.  Returns (recon, mu, logvar) sliced to real widths (bf16)."""
    B, d = x.shape
    dz = eps.shape[1]
    d_pad = params["wg1"].shape[1]
    h_pad = params["w0"].shape[1]
    z_pad = params["whead"].shape[1] // 2
    out_w = d_pad + 2 * z_pad

    # Keep >= 2 grid steps when the batch allows it so the "parallel" batch
    # axis can shard across both v7x TensorCores; round to the 8-row granule.
    if B >= 16:
        tile_b = min(tile_b, _round_up(pl.cdiv(B, 2), 8))
    else:
        tile_b = _round_up(max(B, 1), 8)
    b_pad = _round_up(B, tile_b)
    grid = (b_pad // tile_b,)

    # Pad the batch dim only when actually needed; feature dims stay unpadded
    # (no wrapper-side pad materialization / extra HBM pass).
    if b_pad != B:
        x = jnp.pad(x, ((0, b_pad - B), (0, 0)))
        eps = jnp.pad(eps, ((0, b_pad - B), (0, 0)))

    def const(shape):
        # Weights/biases: same block every grid step -> VMEM resident.
        if single_buffer_weights:
            return pl.BlockSpec(shape, lambda i: (0, 0),
                                pipeline_mode=pl.Buffered(1))
        return pl.BlockSpec(shape, lambda i: (0, 0))

    weight_bytes = sum(int(p.size) * p.dtype.itemsize for p in params.values())
    cost = pl.CostEstimate(
        flops=int(2 * b_pad * (d * h_pad + h_pad * 2 * z_pad
                               + dz * h_pad + h_pad * d_pad)),
        transcendentals=int(b_pad * dz),
        bytes_accessed=int(x.size * x.dtype.itemsize
                           + eps.size * eps.dtype.itemsize
                           + b_pad * out_w * 2
                           + weight_bytes),
    )

    packed = pl.pallas_call(
        vae_kernel,
        out_shape=jax.ShapeDtypeStruct((b_pad, out_w), jnp.bfloat16),
        grid_spec=pltpu.PrefetchScalarGridSpec(
            num_scalar_prefetch=0,
            grid=grid,
            in_specs=[
                pl.BlockSpec((tile_b, d), lambda i: (i, 0)),    # x   (f32, real width)
                pl.BlockSpec((tile_b, dz), lambda i: (i, 0)),   # eps (bf16, real width)
                const(params["w0"].shape), const(params["b0"].shape),
                const(params["whead"].shape), const(params["bhead"].shape),
                const(params["wg0"].shape), const(params["bg0"].shape),
                const(params["wg1"].shape), const(params["bg1"].shape),
            ],
            out_specs=pl.BlockSpec((tile_b, out_w), lambda i: (i, 0)),
        ),
        compiler_params=pltpu.CompilerParams(
            dimension_semantics=("parallel",)),
        cost_estimate=cost,
    )(x, eps,
      params["w0"], params["b0"], params["whead"], params["bhead"],
      params["wg0"], params["bg0"], params["wg1"], params["bg1"])

    recon = packed[:B, :d]
    mu = packed[:B, d_pad:d_pad + dz]
    logvar = packed[:B, d_pad + z_pad:d_pad + z_pad + dz]
    return recon, mu, logvar


def xavier_normal(key, fan_out, fan_in):
    # matches torch.nn.init.xavier_normal_ for a (fan_out, fan_in) Linear weight
    std = (2.0 / (fan_in + fan_out)) ** 0.5
    return std * jax.random.normal(key, (fan_out, fan_in), dtype=jnp.float32)


def _pad2(w, rows, cols, dtype):
    out = jnp.zeros((rows, cols), dtype)
    return out.at[:w.shape[0], :w.shape[1]].set(w.astype(dtype))


def make_params(key, d, layers):
    """Deterministic parameters mirroring the PyTorch module (l = 2 config).

    darray = [d] + layers:
      inet[0]: d -> layers[0]
      mu/sigma: layers[0] -> layers[1]   (fused into one 'whead' slab here)
      gnet[0]:  layers[1] -> layers[0]
      gnet[1]:  layers[0] -> d           (no relu)
    Weights are transposed to (in, out) and stored bf16.  Output (N) dims are
    zero-padded to 128 lanes; the K dims that consume HBM-streamed activations
    (d for inet[0], dz for gnet[0]) are left unpadded.  Biases are zero, f32,
    shaped (1, out_pad), matching constant_(bias, 0) in the torch init.
    """
    l = len(layers)
    assert l == 2, "this script instantiates the l=2 configuration"
    darray = [d] + list(layers)
    hidden, dz = darray[1], darray[2]
    d_pad, h_pad, z_pad = (_round_up(v, LANE) for v in (d, hidden, dz))
    keys = jax.random.split(key, 5)

    # torch layout (out, in); transpose to (in, out) so kernel does y = x @ W + b
    w0 = xavier_normal(keys[0], hidden, d).T       # inet[0]: (d, hidden)
    wmu = xavier_normal(keys[1], dz, hidden).T     # mu head: (hidden, dz)
    wsig = xavier_normal(keys[2], dz, hidden).T    # sigma head: (hidden, dz)
    wg0 = xavier_normal(keys[3], hidden, dz).T     # gnet[0]: (dz, hidden)
    wg1 = xavier_normal(keys[4], d, hidden).T      # gnet[1]: (hidden, d)

    bf = jnp.bfloat16
    return {
        "w0": _pad2(w0, d, h_pad, bf),                 # K = d (unpadded)
        "b0": jnp.zeros((1, h_pad), jnp.float32),
        # fused mu|logvar head: mu in cols [:z_pad], logvar in cols [z_pad:]
        "whead": jnp.concatenate(
            [_pad2(wmu, h_pad, z_pad, bf), _pad2(wsig, h_pad, z_pad, bf)],
            axis=1),
        "bhead": jnp.zeros((1, 2 * z_pad), jnp.float32),
        "wg0": _pad2(wg0, dz, h_pad, bf),              # K = dz (unpadded)
        "bg0": jnp.zeros((1, h_pad), jnp.float32),
        "wg1": _pad2(wg1, h_pad, d_pad, bf),
        "bg1": jnp.zeros((1, d_pad), jnp.float32),
    }


def vae_reference(x, eps, params):
    """Pure-JAX reference using identical bf16-operand / f32-accumulate math."""
    d = x.shape[1]
    dz = eps.shape[1]
    z_pad = params["whead"].shape[1] // 2

    def dot(a, w):
        return jnp.dot(a.astype(jnp.bfloat16), w,
                       preferred_element_type=jnp.float32)

    h = jnp.maximum(dot(x, params["w0"]) + params["b0"], 0.0)
    head = dot(h, params["whead"]) + params["bhead"]
    mu = head[:, :dz]
    logvar = head[:, z_pad:z_pad + dz]
    z = mu + eps.astype(jnp.float32) * jnp.exp(0.5 * logvar)
    g = jnp.maximum(dot(z, params["wg0"]) + params["bg0"], 0.0)
    recon = dot(g, params["wg1"]) + params["bg1"]
    # kernel writes its packed output as bf16; quantize the same way
    q = lambda a: a.astype(jnp.bfloat16).astype(jnp.float32)
    return q(recon[:, :d]), q(mu), q(logvar)


if __name__ == "__main__":
    # Module config: args.d = 64, args.layer = [32, 16].
    # Batch sized to a couple of tiles so the batch grid (and both v7x cores)
    # are exercised.
    d = 64
    layers = [32, 16]
    dz = layers[-1]
    B = 256

    root = jax.random.PRNGKey(0)
    k_params, k_x, k_eps = jax.random.split(root, 3)

    params = make_params(k_params, d, layers)
    x = jax.random.normal(k_x, (B, d), dtype=jnp.float32)
    # eps drawn deterministically, stored bf16 (half the HBM stream);
    # training-mode reparameterization semantics.
    eps = jax.random.normal(k_eps, (B, dz), dtype=jnp.float32).astype(jnp.bfloat16)

    try:
        recon, mu, logvar = vae_forward(x, eps, params)
    except Exception:
        # single-buffered resident weights are an optimization only; fall back
        # to default double-buffering if pipeline_mode=pl.Buffered(1) is not
        # supported by this jax build.
        recon, mu, logvar = vae_forward(x, eps, params,
                                        single_buffer_weights=False)
    jax.block_until_ready((recon, mu, logvar))

    # correctness check against a pure-JAX reference using identical bf16 math
    r_ref, mu_ref, lv_ref = vae_reference(x, eps, params)
    assert recon.shape == (B, d) and mu.shape == (B, dz) and logvar.shape == (B, dz)
    assert jnp.allclose(recon.astype(jnp.float32), r_ref, atol=2e-2, rtol=2e-2)
    assert jnp.allclose(mu.astype(jnp.float32), mu_ref, atol=2e-2, rtol=2e-2)
    assert jnp.allclose(logvar.astype(jnp.float32), lv_ref, atol=2e-2, rtol=2e-2)

    print("KERNEL_OK")
</pallas_src>

<mosaic_0001>
module attributes {stable_mosaic.version = 11 : i64} {
  func.func @vae_kernel(%arg0: i32, %arg1: memref<128x64xf32, #tpu.memory_space<vmem>>, %arg2: memref<128x16xbf16, #tpu.memory_space<vmem>>, %arg3: memref<64x128xbf16, #tpu.memory_space<vmem>>, %arg4: memref<1x128xf32, #tpu.memory_space<vmem>>, %arg5: memref<128x256xbf16, #tpu.memory_space<vmem>>, %arg6: memref<1x256xf32, #tpu.memory_space<vmem>>, %arg7: memref<16x128xbf16, #tpu.memory_space<vmem>>, %arg8: memref<1x128xf32, #tpu.memory_space<vmem>>, %arg9: memref<128x128xbf16, #tpu.memory_space<vmem>>, %arg10: memref<1x128xf32, #tpu.memory_space<vmem>>, %arg11: memref<128x384xbf16, #tpu.memory_space<vmem>>) attributes {dimension_semantics = [#tpu.dimension_semantics<parallel>], iteration_bounds = array<i64: 2>, scalar_prefetch = 0 : i64, scratch_operands = 0 : i64, tpu.core_type = #tpu.core_type<tc>, window_params = [{transform_indices = @transform_0, window_bounds = array<i64: 128, 64>}, {transform_indices = @transform_1, window_bounds = array<i64: 128, 16>}, {pipeline_mode = #tpu.pipeline_mode<synchronous>, transform_indices = @transform_2, window_bounds = array<i64: 64, 128>}, {pipeline_mode = #tpu.pipeline_mode<synchronous>, transform_indices = @transform_3, window_bounds = array<i64: 1, 128>}, {pipeline_mode = #tpu.pipeline_mode<synchronous>, transform_indices = @transform_4, window_bounds = array<i64: 128, 256>}, {pipeline_mode = #tpu.pipeline_mode<synchronous>, transform_indices = @transform_5, window_bounds = array<i64: 1, 256>}, {pipeline_mode = #tpu.pipeline_mode<synchronous>, transform_indices = @transform_6, window_bounds = array<i64: 16, 128>}, {pipeline_mode = #tpu.pipeline_mode<synchronous>, transform_indices = @transform_7, window_bounds = array<i64: 1, 128>}, {pipeline_mode = #tpu.pipeline_mode<synchronous>, transform_indices = @transform_8, window_bounds = array<i64: 128, 128>}, {pipeline_mode = #tpu.pipeline_mode<synchronous>, transform_indices = @transform_9, window_bounds = array<i64: 1, 128>}, {transform_indices = @transform_10, window_bounds = array<i64: 128, 384>}]} {
    %c0 = arith.constant 0 : index
    %c0_0 = arith.constant 0 : index
    %0 = vector.load %arg1[%c0, %c0_0] : memref<128x64xf32, #tpu.memory_space<vmem>>, vector<128x64xf32>
    %1 = arith.truncf %0 : vector<128x64xf32> to vector<128x64xbf16>
    %c0_1 = arith.constant 0 : index
    %c0_2 = arith.constant 0 : index
    %2 = vector.load %arg3[%c0_1, %c0_2] : memref<64x128xbf16, #tpu.memory_space<vmem>>, vector<64x128xbf16>
    %cst = arith.constant dense<0.000000e+00> : vector<128x128xf32>
    %3 = tpu.matmul %1, %2, %cst {dimension_numbers = #tpu.dot_dimension_numbers<[1], [0], [0], [1], [0, 0, 1, 1], [], []>} : vector<128x64xbf16>, vector<64x128xbf16>, vector<128x128xf32> -> vector<128x128xf32>
    %c0_3 = arith.constant 0 : index
    %c0_4 = arith.constant 0 : index
    %4 = vector.load %arg4[%c0_3, %c0_4] : memref<1x128xf32, #tpu.memory_space<vmem>>, vector<1x128xf32>
    %5 = vector.broadcast %4 : vector<1x128xf32> to vector<128x128xf32>
    %6 = arith.addf %3, %5 : vector<128x128xf32>
    %cst_5 = arith.constant 0.000000e+00 : f32
    %7 = vector.broadcast %cst_5 : f32 to vector<128x128xf32>
    %8 = arith.maximumf %6, %7 : vector<128x128xf32>
    %9 = arith.truncf %8 : vector<128x128xf32> to vector<128x128xbf16>
    %c0_6 = arith.constant 0 : index
    %c0_7 = arith.constant 0 : index
    %10 = vector.load %arg5[%c0_6, %c0_7] : memref<128x256xbf16, #tpu.memory_space<vmem>>, vector<128x256xbf16>
    %cst_8 = arith.constant dense<0.000000e+00> : vector<128x256xf32>
    %11 = tpu.matmul %9, %10, %cst_8 {dimension_numbers = #tpu.dot_dimension_numbers<[1], [0], [0], [1], [0, 0, 1, 1], [], []>} : vector<128x128xbf16>, vector<128x256xbf16>, vector<128x256xf32> -> vector<128x256xf32>
    %c0_9 = arith.constant 0 : index
    %c0_10 = arith.constant 0 : index
    %12 = vector.load %arg6[%c0_9, %c0_10] : memref<1x256xf32, #tpu.memory_space<vmem>>, vector<1x256xf32>
    %13 = vector.broadcast %12 : vector<1x256xf32> to vector<128x256xf32>
    %14 = arith.addf %11, %13 : vector<128x256xf32>
    %15 = arith.truncf %14 : vector<128x256xf32> to vector<128x256xbf16>
    %c0_11 = arith.constant 0 : index
    %c128 = arith.constant 128 : index
    %16 = vector.load %arg11[%c0_11, %c128] : memref<128x384xbf16, #tpu.memory_space<vmem>>, vector<128x256xbf16>
    tpu.vector_store %arg11[%c0_11, %c128], %15 {strides = array<i32>} : memref<128x384xbf16, #tpu.memory_space<vmem>>, vector<128x256xbf16>,
    %17 = vector.extract_strided_slice %14 {offsets = [0, 0], sizes = [128, 16], strides = [1, 1]} : vector<128x256xf32> to vector<128x16xf32>
    %18 = vector.extract_strided_slice %14 {offsets = [0, 128], sizes = [128, 16], strides = [1, 1]} : vector<128x256xf32> to vector<128x16xf32>
    %c0_12 = arith.constant 0 : index
    %c0_13 = arith.constant 0 : index
    %19 = vector.load %arg2[%c0_12, %c0_13] : memref<128x16xbf16, #tpu.memory_space<vmem>>, vector<128x16xbf16>
    %20 = arith.extf %19 : vector<128x16xbf16> to vector<128x16xf32>
    %cst_14 = arith.constant 5.000000e-01 : f32
    %21 = vector.broadcast %cst_14 : f32 to vector<128x16xf32>
    %22 = arith.mulf %21, %18 : vector<128x16xf32>
    %23 = math.exp %22 : vector<128x16xf32>
    %24 = arith.mulf %20, %23 : vector<128x16xf32>
    %25 = arith.addf %17, %24 : vector<128x16xf32>
    %26 = arith.truncf %25 : vector<128x16xf32> to vector<128x16xbf16>
    %c0_15 = arith.constant 0 : index
    %c0_16 = arith.constant 0 : index
    %27 = vector.load %arg7[%c0_15, %c0_16] : memref<16x128xbf16, #tpu.memory_space<vmem>>, vector<16x128xbf16>
    %cst_17 = arith.constant dense<0.000000e+00> : vector<128x128xf32>
    %28 = tpu.matmul %26, %27, %cst_17 {dimension_numbers = #tpu.dot_dimension_numbers<[1], [0], [0], [1], [0, 0, 1, 1], [], []>} : vector<128x16xbf16>, vector<16x128xbf16>, vector<128x128xf32> -> vector<128x128xf32>
    %c0_18 = arith.constant 0 : index
    %c0_19 = arith.constant 0 : index
    %29 = vector.load %arg8[%c0_18, %c0_19] : memref<1x128xf32, #tpu.memory_space<vmem>>, vector<1x128xf32>
    %30 = vector.broadcast %29 : vector<1x128xf32> to vector<128x128xf32>
    %31 = arith.addf %28, %30 : vector<128x128xf32>
    %cst_20 = arith.constant 0.000000e+00 : f32
    %32 = vector.broadcast %cst_20 : f32 to vector<128x128xf32>
    %33 = arith.maximumf %31, %32 : vector<128x128xf32>
    %34 = arith.truncf %33 : vector<128x128xf32> to vector<128x128xbf16>
    %c0_21 = arith.constant 0 : index
    %c0_22 = arith.constant 0 : index
    %35 = vector.load %arg9[%c0_21, %c0_22] : memref<128x128xbf16, #tpu.memory_space<vmem>>, vector<128x128xbf16>
    %cst_23 = arith.constant dense<0.000000e+00> : vector<128x128xf32>
    %36 = tpu.matmul %34, %35, %cst_23 {dimension_numbers = #tpu.dot_dimension_numbers<[1], [0], [0], [1], [0, 0, 1, 1], [], []>} : vector<128x128xbf16>, vector<128x128xbf16>, vector<128x128xf32> -> vector<128x128xf32>
    %c0_24 = arith.constant 0 : index
    %c0_25 = arith.constant 0 : index
    %37 = vector.load %arg10[%c0_24, %c0_25] : memref<1x128xf32, #tpu.memory_space<vmem>>, vector<1x128xf32>
    %38 = vector.broadcast %37 : vector<1x128xf32> to vector<128x128xf32>
    %39 = arith.addf %36, %38 : vector<128x128xf32>
    %40 = arith.truncf %39 : vector<128x128xf32> to vector<128x128xbf16>
    %c0_26 = arith.constant 0 : index
    %c0_27 = arith.constant 0 : index
    %41 = vector.load %arg11[%c0_26, %c0_27] : memref<128x384xbf16, #tpu.memory_space<vmem>>, vector<128x128xbf16>
    tpu.vector_store %arg11[%c0_26, %c0_27], %40 {strides = array<i32>} : memref<128x384xbf16, #tpu.memory_space<vmem>>, vector<128x128xbf16>,
    return
  }
  func.func @transform_0(%arg0: i32) -> (i32, i32) {
    %c0_i32 = arith.constant 0 : i32
    %c0_i32_0 = arith.constant 0 : i32
    return %arg0, %c0_i32 : i32, i32
  }
  func.func @transform_1(%arg0: i32) -> (i32, i32) {
    %c0_i32 = arith.constant 0 : i32
    %c0_i32_0 = arith.constant 0 : i32
    return %arg0, %c0_i32 : i32, i32
  }
  func.func @transform_2(%arg0: i32) -> (i32, i32) {
    %c0_i32 = arith.constant 0 : i32
    %c0_i32_0 = arith.constant 0 : i32
    %c0_i32_1 = arith.constant 0 : i32
    return %c0_i32, %c0_i32_0 : i32, i32
  }
  func.func @transform_3(%arg0: i32) -> (i32, i32) {
    %c0_i32 = arith.constant 0 : i32
    %c0_i32_0 = arith.constant 0 : i32
    %c0_i32_1 = arith.constant 0 : i32
    return %c0_i32, %c0_i32_0 : i32, i32
  }
  func.func @transform_4(%arg0: i32) -> (i32, i32) {
    %c0_i32 = arith.constant 0 : i32
    %c0_i32_0 = arith.constant 0 : i32
    %c0_i32_1 = arith.constant 0 : i32
    return %c0_i32, %c0_i32_0 : i32, i32
  }
  func.func @transform_5(%arg0: i32) -> (i32, i32) {
    %c0_i32 = arith.constant 0 : i32
    %c0_i32_0 = arith.constant 0 : i32
    %c0_i32_1 = arith.constant 0 : i32
    return %c0_i32, %c0_i32_0 : i32, i32
  }
  func.func @transform_6(%arg0: i32) -> (i32, i32) {
    %c0_i32 = arith.constant 0 : i32
    %c0_i32_0 = arith.constant 0 : i32
    %c0_i32_1 = arith.constant 0 : i32
    return %c0_i32, %c0_i32_0 : i32, i32
  }
  func.func @transform_7(%arg0: i32) -> (i32, i32) {
    %c0_i32 = arith.constant 0 : i32
    %c0_i32_0 = arith.constant 0 : i32
    %c0_i32_1 = arith.constant 0 : i32
    return %c0_i32, %c0_i32_0 : i32, i32
  }
  func.func @transform_8(%arg0: i32) -> (i32, i32) {
    %c0_i32 = arith.constant 0 : i32
    %c0_i32_0 = arith.constant 0 : i32
    %c0_i32_1 = arith.constant 0 : i32
    return %c0_i32, %c0_i32_0 : i32, i32
  }
  func.func @transform_9(%arg0: i32) -> (i32, i32) {
    %c0_i32 = arith.constant 0 : i32
    %c0_i32_0 = arith.constant 0 : i32
    %c0_i32_1 = arith.constant 0 : i32
    return %c0_i32, %c0_i32_0 : i32, i32
  }
  func.func @transform_10(%arg0: i32) -> (i32, i32) {
    %c0_i32 = arith.constant 0 : i32
    %c0_i32_0 = arith.constant 0 : i32
    return %arg0, %c0_i32 : i32, i32
  }
}

module attributes {stable_mosaic.version = 11 : i64} {
  func.func @vae_kernel(%arg0: i32, %arg1: memref<128x64xf32, #tpu.memory_space<vmem>>, %arg2: memref<128x16xbf16, #tpu.memory_space<vmem>>, %arg3: memref<64x128xbf16, #tpu.memory_space<vmem>>, %arg4: memref<1x128xf32, #tpu.memory_space<vmem>>, %arg5: memref<128x256xbf16, #tpu.memory_space<vmem>>, %arg6: memref<1x256xf32, #tpu.memory_space<vmem>>, %arg7: memref<16x128xbf16, #tpu.memory_space<vmem>>, %arg8: memref<1x128xf32, #tpu.memory_space<vmem>>, %arg9: memref<128x128xbf16, #tpu.memory_space<vmem>>, %arg10: memref<1x128xf32, #tpu.memory_space<vmem>>, %arg11: memref<128x384xbf16, #tpu.memory_space<vmem>>) attributes {dimension_semantics = [#tpu.dimension_semantics<parallel>], iteration_bounds = array<i64: 2>, scalar_prefetch = 0 : i64, scratch_operands = 0 : i64, tpu.core_type = #tpu.core_type<tc>, window_params = [{transform_indices = @transform_0, window_bounds = array<i64: 128, 64>}, {transform_indices = @transform_1, window_bounds = array<i64: 128, 16>}, {pipeline_mode = #tpu.pipeline_mode<synchronous>, transform_indices = @transform_2, window_bounds = array<i64: 64, 128>}, {pipeline_mode = #tpu.pipeline_mode<synchronous>, transform_indices = @transform_3, window_bounds = array<i64: 1, 128>}, {pipeline_mode = #tpu.pipeline_mode<synchronous>, transform_indices = @transform_4, window_bounds = array<i64: 128, 256>}, {pipeline_mode = #tpu.pipeline_mode<synchronous>, transform_indices = @transform_5, window_bounds = array<i64: 1, 256>}, {pipeline_mode = #tpu.pipeline_mode<synchronous>, transform_indices = @transform_6, window_bounds = array<i64: 16, 128>}, {pipeline_mode = #tpu.pipeline_mode<synchronous>, transform_indices = @transform_7, window_bounds = array<i64: 1, 128>}, {pipeline_mode = #tpu.pipeline_mode<synchronous>, transform_indices = @transform_8, window_bounds = array<i64: 128, 128>}, {pipeline_mode = #tpu.pipeline_mode<synchronous>, transform_indices = @transform_9, window_bounds = array<i64: 1, 128>}, {transform_indices = @transform_10, window_bounds = array<i64: 128, 384>}]} {
    %c0 = arith.constant 0 : index
    %c0_0 = arith.constant 0 : index
    %0 = vector.load %arg1[%c0, %c0_0] : memref<128x64xf32, #tpu.memory_space<vmem>>, vector<128x64xf32>
    %1 = arith.truncf %0 : vector<128x64xf32> to vector<128x64xbf16>
    %c0_1 = arith.constant 0 : index
    %c0_2 = arith.constant 0 : index
    %2 = vector.load %arg3[%c0_1, %c0_2] : memref<64x128xbf16, #tpu.memory_space<vmem>>, vector<64x128xbf16>
    %cst = arith.constant dense<0.000000e+00> : vector<128x128xf32>
    %3 = tpu.matmul %1, %2, %cst {dimension_numbers = #tpu.dot_dimension_numbers<[1], [0], [0], [1], [0, 0, 1, 1], [], []>} : vector<128x64xbf16>, vector<64x128xbf16>, vector<128x128xf32> -> vector<128x128xf32>
    %c0_3 = arith.constant 0 : index
    %c0_4 = arith.constant 0 : index
    %4 = vector.load %arg4[%c0_3, %c0_4] : memref<1x128xf32, #tpu.memory_space<vmem>>, vector<1x128xf32>
    %5 = vector.broadcast %4 : vector<1x128xf32> to vector<128x128xf32>
    %6 = arith.addf %3, %5 : vector<128x128xf32>
    %cst_5 = arith.constant 0.000000e+00 : f32
    %7 = vector.broadcast %cst_5 : f32 to vector<128x128xf32>
    %8 = arith.maximumf %6, %7 : vector<128x128xf32>
    %9 = arith.truncf %8 : vector<128x128xf32> to vector<128x128xbf16>
    %c0_6 = arith.constant 0 : index
    %c0_7 = arith.constant 0 : index
    %10 = vector.load %arg5[%c0_6, %c0_7] : memref<128x256xbf16, #tpu.memory_space<vmem>>, vector<128x256xbf16>
    %cst_8 = arith.constant dense<0.000000e+00> : vector<128x256xf32>
    %11 = tpu.matmul %9, %10, %cst_8 {dimension_numbers = #tpu.dot_dimension_numbers<[1], [0], [0], [1], [0, 0, 1, 1], [], []>} : vector<128x128xbf16>, vector<128x256xbf16>, vector<128x256xf32> -> vector<128x256xf32>
    %c0_9 = arith.constant 0 : index
    %c0_10 = arith.constant 0 : index
    %12 = vector.load %arg6[%c0_9, %c0_10] : memref<1x256xf32, #tpu.memory_space<vmem>>, vector<1x256xf32>
    %13 = vector.broadcast %12 : vector<1x256xf32> to vector<128x256xf32>
    %14 = arith.addf %11, %13 : vector<128x256xf32>
    %15 = arith.truncf %14 : vector<128x256xf32> to vector<128x256xbf16>
    %c0_11 = arith.constant 0 : index
    %c128 = arith.constant 128 : index
    %16 = vector.load %arg11[%c0_11, %c128] : memref<128x384xbf16, #tpu.memory_space<vmem>>, vector<128x256xbf16>
    tpu.vector_store %arg11[%c0_11, %c128], %15 {strides = array<i32>} : memref<128x384xbf16, #tpu.memory_space<vmem>>, vector<128x256xbf16>,
    %17 = vector.extract_strided_slice %14 {offsets = [0, 0], sizes = [128, 16], strides = [1, 1]} : vector<128x256xf32> to vector<128x16xf32>
    %18 = vector.extract_strided_slice %14 {offsets = [0, 128], sizes = [128, 16], strides = [1, 1]} : vector<128x256xf32> to vector<128x16xf32>
    %c0_12 = arith.constant 0 : index
    %c0_13 = arith.constant 0 : index
    %19 = vector.load %arg2[%c0_12, %c0_13] : memref<128x16xbf16, #tpu.memory_space<vmem>>, vector<128x16xbf16>
    %20 = arith.extf %19 : vector<128x16xbf16> to vector<128x16xf32>
    %cst_14 = arith.constant 5.000000e-01 : f32
    %21 = vector.broadcast %cst_14 : f32 to vector<128x16xf32>
    %22 = arith.mulf %21, %18 : vector<128x16xf32>
    %23 = math.exp %22 : vector<128x16xf32>
    %24 = arith.mulf %20, %23 : vector<128x16xf32>
    %25 = arith.addf %17, %24 : vector<128x16xf32>
    %26 = arith.truncf %25 : vector<128x16xf32> to vector<128x16xbf16>
    %c0_15 = arith.constant 0 : index
    %c0_16 = arith.constant 0 : index
    %27 = vector.load %arg7[%c0_15, %c0_16] : memref<16x128xbf16, #tpu.memory_space<vmem>>, vector<16x128xbf16>
    %cst_17 = arith.constant dense<0.000000e+00> : vector<128x128xf32>
    %28 = tpu.matmul %26, %27, %cst_17 {dimension_numbers = #tpu.dot_dimension_numbers<[1], [0], [0], [1], [0, 0, 1, 1], [], []>} : vector<128x16xbf16>, vector<16x128xbf16>, vector<128x128xf32> -> vector<128x128xf32>
    %c0_18 = arith.constant 0 : index
    %c0_19 = arith.constant 0 : index
    %29 = vector.load %arg8[%c0_18, %c0_19] : memref<1x128xf32, #tpu.memory_space<vmem>>, vector<1x128xf32>
    %30 = vector.broadcast %29 : vector<1x128xf32> to vector<128x128xf32>
    %31 = arith.addf %28, %30 : vector<128x128xf32>
    %cst_20 = arith.constant 0.000000e+00 : f32
    %32 = vector.broadcast %cst_20 : f32 to vector<128x128xf32>
    %33 = arith.maximumf %31, %32 : vector<128x128xf32>
    %34 = arith.truncf %33 : vector<128x128xf32> to vector<128x128xbf16>
    %c0_21 = arith.constant 0 : index
    %c0_22 = arith.constant 0 : index
    %35 = vector.load %arg9[%c0_21, %c0_22] : memref<128x128xbf16, #tpu.memory_space<vmem>>, vector<128x128xbf16>
    %cst_23 = arith.constant dense<0.000000e+00> : vector<128x128xf32>
    %36 = tpu.matmul %34, %35, %cst_23 {dimension_numbers = #tpu.dot_dimension_numbers<[1], [0], [0], [1], [0, 0, 1, 1], [], []>} : vector<128x128xbf16>, vector<128x128xbf16>, vector<128x128xf32> -> vector<128x128xf32>
    %c0_24 = arith.constant 0 : index
    %c0_25 = arith.constant 0 : index
    %37 = vector.load %arg10[%c0_24, %c0_25] : memref<1x128xf32, #tpu.memory_space<vmem>>, vector<1x128xf32>
    %38 = vector.broadcast %37 : vector<1x128xf32> to vector<128x128xf32>
    %39 = arith.addf %36, %38 : vector<128x128xf32>
    %40 = arith.truncf %39 : vector<128x128xf32> to vector<128x128xbf16>
    %c0_26 = arith.constant 0 : index
    %c0_27 = arith.constant 0 : index
    %41 = vector.load %arg11[%c0_26, %c0_27] : memref<128x384xbf16, #tpu.memory_space<vmem>>, vector<128x128xbf16>
    tpu.vector_store %arg11[%c0_26, %c0_27], %40 {strides = array<i32>} : memref<128x384xbf16, #tpu.memory_space<vmem>>, vector<128x128xbf16>,
    return
  }
  func.func @transform_0(%arg0: i32) -> (i32, i32) {
    %c0_i32 = arith.constant 0 : i32
    %c0_i32_0 = arith.constant 0 : i32
    return %arg0, %c0_i32 : i32, i32
  }
  func.func @transform_1(%arg0: i32) -> (i32, i32) {
    %c0_i32 = arith.constant 0 : i32
    %c0_i32_0 = arith.constant 0 : i32
    return %arg0, %c0_i32 : i32, i32
  }
  func.func @transform_2(%arg0: i32) -> (i32, i32) {
    %c0_i32 = arith.constant 0 : i32
    %c0_i32_0 = arith.constant 0 : i32
    %c0_i32_1 = arith.constant 0 : i32
    return %c0_i32, %c0_i32_0 : i32, i32
  }
  func.func @transform_3(%arg0: i32) -> (i32, i32) {
    %c0_i32 = arith.constant 0 : i32
    %c0_i32_0 = arith.constant 0 : i32
    %c0_i32_1 = arith.constant 0 : i32
    return %c0_i32, %c0_i32_0 : i32, i32
  }
  func.func @transform_4(%arg0: i32) -> (i32, i32) {
    %c0_i32 = arith.constant 0 : i32
    %c0_i32_0 = arith.constant 0 : i32
    %c0_i32_1 = arith.constant 0 : i32
    return %c0_i32, %c0_i32_0 : i32, i32
  }
  func.func @transform_5(%arg0: i32) -> (i32, i32) {
    %c0_i32 = arith.constant 0 : i32
    %c0_i32_0 = arith.constant 0 : i32
    %c0_i32_1 = arith.constant 0 : i32
    return %c0_i32, %c0_i32_0 : i32, i32
  }
  func.func @transform_6(%arg0: i32) -> (i32, i32) {
    %c0_i32 = arith.constant 0 : i32
    %c0_i32_0 = arith.constant 0 : i32
    %c0_i32_1 = arith.constant 0 : i32
    return %c0_i32, %c0_i32_0 : i32, i32
  }
  func.func @transform_7(%arg0: i32) -> (i32, i32) {
    %c0_i32 = arith.constant 0 : i32
    %c0_i32_0 = arith.constant 0 : i32
    %c0_i32_1 = arith.constant 0 : i32
    return %c0_i32, %c0_i32_0 : i32, i32
  }
  func.func @transform_8(%arg0: i32) -> (i32, i32) {
    %c0_i32 = arith.constant 0 : i32
    %c0_i32_0 = arith.constant 0 : i32
    %c0_i32_1 = arith.constant 0 : i32
    return %c0_i32, %c0_i32_0 : i32, i32
  }
  func.func @transform_9(%arg0: i32) -> (i32, i32) {
    %c0_i32 = arith.constant 0 : i32
    %c0_i32_0 = arith.constant 0 : i32
    %c0_i32_1 = arith.constant 0 : i32
    return %c0_i32, %c0_i32_0 : i32, i32
  }
  func.func @transform_10(%arg0: i32) -> (i32, i32) {
    %c0_i32 = arith.constant 0 : i32
    %c0_i32_0 = arith.constant 0 : i32
    return %arg0, %c0_i32 : i32, i32
  }
}

</mosaic_0001>

<llo_original>
// kernel: tpu_custom_call.1
$region0: #{tpu_custom_call.1}
  #allocation0 [shape = 'u32[]', space=smem, size = 0x4, offset = 0x4, fixed_abs, tag = 'smem constant byte address 0x4 - core index']
  #allocation1 [shape = 'u32[144,128]{1,0:T(1,128)}', space=vmem, size = 0x12000, scoped, tag = 'internal scratch']
  %s0 = inlined_call_operand.vmem [shape: f32[256,64], index: 0, kind: input, shape index: {}]
  %s1 = inlined_call_operand.vmem [shape: bf16[256,16], index: 1, kind: input, shape index: {}]
  %s2 = inlined_call_operand.vmem [shape: bf16[64,128], index: 2, kind: input, shape index: {}]
  %s3 = inlined_call_operand.vmem [shape: f32[1,128], index: 3, kind: input, shape index: {}]
  %s4 = inlined_call_operand.vmem [shape: bf16[128,256], index: 4, kind: input, shape index: {}]
  %s5 = inlined_call_operand.vmem [shape: f32[1,256], index: 5, kind: input, shape index: {}]
  %s6 = inlined_call_operand.vmem [shape: bf16[16,128], index: 6, kind: input, shape index: {}]
  %s7 = inlined_call_operand.vmem [shape: f32[1,128], index: 7, kind: input, shape index: {}]
  %s8 = inlined_call_operand.vmem [shape: bf16[128,128], index: 8, kind: input, shape index: {}]
  %s9 = inlined_call_operand.vmem [shape: f32[1,128], index: 9, kind: input, shape index: {}]
  %s10 = inlined_call_operand.hbm [shape: bf16[256,384], index: 10, kind: output, shape index: {}]
  %s11 = sld [smem:[#allocation0]]
  $region73: #{tpu_custom_call.1} parent=0
    _
  %s13 = ssub.s32 1, %s11
  %s14 = scalar_select 0, %s13, %s11
  $region1: #{tpu_custom_call.1} parent=0
    #allocation2 [shape = 'u8[196608]{0}', space=vmem, size = 0x30000, scoped, tag = 'output window, operand 0']
    #allocation3 [shape = 's32[2]{0}', space=sflag, size = 0x8, scoped, tag = 'scoped memory for tpu_custom_call.1']
    %15 = vsyncpa [#allocation3], 0
    %s16 = scalar_lea.sflag [#allocation3], 1
    %17 = vsyncpa %s16, 0
    loop: start=0, step=1, limit=4
    $region2: #{tpu_custom_call.1} parent=1 // loop_pre_header
      _
    $region3: #{tpu_custom_call.1} parent=1 // loop_header
      %s19 = sphi 0, %s23
      %p20 = scmp.ge.s32.totalorder %s19, 4
      %s29 = sphi 0, %s31
      %s32 = sphi 0, %s29
      %s33 = sphi 0, %s32
      %s49 = sphi 0, %s33
      %s55 = sphi 0, %s57
      %s58 = sphi 0, %s55
      %s59 = sphi 0, %s58
      %s75 = sphi 0, %s59
      %s79 = sphi 0, %s79
      %s81 = sphi 0, %s79
      %s82 = sphi 0, %s81
      %s96 = sphi 0, %s82
      %s100 = sphi 0, %s100
      %s102 = sphi 0, %s100
      %s103 = sphi 0, %s102
      %s117 = sphi 0, %s103
      %s121 = sphi 0, %s121
      %s123 = sphi 0, %s121
      %s124 = sphi 0, %s123
      %s138 = sphi 0, %s124
      %s142 = sphi 0, %s142
      %s144 = sphi 0, %s142
      %s145 = sphi 0, %s144
      %s159 = sphi 0, %s145
      %s163 = sphi 0, %s163
      %s165 = sphi 0, %s163
      %s166 = sphi 0, %s165
      %s180 = sphi 0, %s166
      %s184 = sphi 0, %s184
      %s186 = sphi 0, %s184
      %s187 = sphi 0, %s186
      %s201 = sphi 0, %s187
      %s205 = sphi 0, %s205
      %s207 = sphi 0, %s205
      %s208 = sphi 0, %s207
      %s222 = sphi 0, %s208
      %s226 = sphi 0, %s226
      %s228 = sphi 0, %s226
      %s229 = sphi 0, %s228
      %s243 = sphi 0, %s229
      %s249 = sphi 0, %s251
      %s252 = sphi 0, %s249
      %s253 = sphi 0, %s252
      %s269 = sphi 0, %s253
    $region4: #{tpu_custom_call.1} parent=1 // loop_header_branch
      %22 = sbr.rel (%p20) target = $region8
    $region5: #{tpu_custom_call.1} parent=1 // loop_body
      %s24 = ssub.s32 %s19, 1
      %s25 = ssub.s32 %s19, 2
      %s26 = sadd.s32 %s19, 1
      %s27 = ssub.s32 %s19, %s26
      %p28 = scmp.eq.s32.totalorder %s27, 0
      %s30 = sadd.s32 %s29, 1
      %s31 = scalar_select %p28, %s29, %s30
      %p34 = pneg %p28
      %p35 = scmp.eq.s32.totalorder %s19, 1
      %p36 = por %p34, %p35
      %p37 = scmp.ne.s32.totalorder %s29, %s32
      %p38 = scmp.eq.s32.totalorder %s19, 0
      %p39 = por %p37, %p38
      %p40 = scmp.ne.s32.totalorder %s29, %s32
      %p41 = scmp.eq.s32.totalorder %s24, 1
      %p42 = por %p40, %p41
      %p43 = scmp.ne.s32.totalorder %s32, %s33
      %p44 = scmp.eq.s32.totalorder %s24, 0
      %p45 = por %p43, %p44
      %p46 = scmp.ne.s32.totalorder %s32, %s33
      %p47 = scmp.eq.s32.totalorder %s25, 1
      %p48 = por %p46, %p47
      %p50 = scmp.ne.s32.totalorder %s33, %s49
      %p51 = scmp.eq.s32.totalorder %s25, 0
      %p52 = por %p50, %p51
      %s53 = ssub.s32 %s19, %s26
      %p54 = scmp.eq.s32.totalorder %s53, 0
      %s56 = sadd.s32 %s55, 1
      %s57 = scalar_select %p54, %s55, %s56
      %p60 = pneg %p54
      %p61 = scmp.eq.s32.totalorder %s19, 1
      %p62 = por %p60, %p61
      %p63 = scmp.ne.s32.totalorder %s55, %s58
      %p64 = scmp.eq.s32.totalorder %s19, 0
      %p65 = por %p63, %p64
      %p66 = scmp.ne.s32.totalorder %s55, %s58
      %p67 = scmp.eq.s32.totalorder %s24, 1
      %p68 = por %p66, %p67
      %p69 = scmp.ne.s32.totalorder %s58, %s59
      %p70 = scmp.eq.s32.totalorder %s24, 0
      %p71 = por %p69, %p70
      %p72 = scmp.ne.s32.totalorder %s58, %s59
      %p73 = scmp.eq.s32.totalorder %s25, 1
      %p74 = por %p72, %p73
      %p76 = scmp.ne.s32.totalorder %s59, %s75
      %p77 = scmp.eq.s32.totalorder %s25, 0
      %p78 = por %p76, %p77
      %s80 = sadd.s32 %s79, 1
      %p83 = scmp.eq.s32.totalorder %s19, 1
      %p84 = scmp.ne.s32.totalorder %s79, %s81
      %p85 = scmp.eq.s32.totalorder %s19, 0
      %p86 = por %p84, %p85
      %p87 = scmp.ne.s32.totalorder %s79, %s81
      %p88 = scmp.eq.s32.totalorder %s24, 1
      %p89 = por %p87, %p88
      %p90 = scmp.ne.s32.totalorder %s81, %s82
      %p91 = scmp.eq.s32.totalorder %s24, 0
      %p92 = por %p90, %p91
      %p93 = scmp.ne.s32.totalorder %s81, %s82
      %p94 = scmp.eq.s32.totalorder %s25, 1
      %p95 = por %p93, %p94
      %p97 = scmp.ne.s32.totalorder %s82, %s96
      %p98 = scmp.eq.s32.totalorder %s25, 0
      %p99 = por %p97, %p98
      %s101 = sadd.s32 %s100, 1
      %p104 = scmp.eq.s32.totalorder %s19, 1
      %p105 = scmp.ne.s32.totalorder %s100, %s102
      %p106 = scmp.eq.s32.totalorder %s19, 0
      %p107 = por %p105, %p106
      %p108 = scmp.ne.s32.totalorder %s100, %s102
      %p109 = scmp.eq.s32.totalorder %s24, 1
      %p110 = por %p108, %p109
      %p111 = scmp.ne.s32.totalorder %s102, %s103
      %p112 = scmp.eq.s32.totalorder %s24, 0
      %p113 = por %p111, %p112
      %p114 = scmp.ne.s32.totalorder %s102, %s103
      %p115 = scmp.eq.s32.totalorder %s25, 1
      %p116 = por %p114, %p115
      %p118 = scmp.ne.s32.totalorder %s103, %s117
      %p119 = scmp.eq.s32.totalorder %s25, 0
      %p120 = por %p118, %p119
      %s122 = sadd.s32 %s121, 1
      %p125 = scmp.eq.s32.totalorder %s19, 1
      %p126 = scmp.ne.s32.totalorder %s121, %s123
      %p127 = scmp.eq.s32.totalorder %s19, 0
      %p128 = por %p126, %p127
      %p129 = scmp.ne.s32.totalorder %s121, %s123
      %p130 = scmp.eq.s32.totalorder %s24, 1
      %p131 = por %p129, %p130
      %p132 = scmp.ne.s32.totalorder %s123, %s124
      %p133 = scmp.eq.s32.totalorder %s24, 0
      %p134 = por %p132, %p133
      %p135 = scmp.ne.s32.totalorder %s123, %s124
      %p136 = scmp.eq.s32.totalorder %s25, 1
      %p137 = por %p135, %p136
      %p139 = scmp.ne.s32.totalorder %s124, %s138
      %p140 = scmp.eq.s32.totalorder %s25, 0
      %p141 = por %p139, %p140
      %s143 = sadd.s32 %s142, 1
      %p146 = scmp.eq.s32.totalorder %s19, 1
      %p147 = scmp.ne.s32.totalorder %s142, %s144
      %p148 = scmp.eq.s32.totalorder %s19, 0
      %p149 = por %p147, %p148
      %p150 = scmp.ne.s32.totalorder %s142, %s144
      %p151 = scmp.eq.s32.totalorder %s24, 1
      %p152 = por %p150, %p151
      %p153 = scmp.ne.s32.totalorder %s144, %s145
      %p154 = scmp.eq.s32.totalorder %s24, 0
      %p155 = por %p153, %p154
      %p156 = scmp.ne.s32.totalorder %s144, %s145
      %p157 = scmp.eq.s32.totalorder %s25, 1
      %p158 = por %p156, %p157
      %p160 = scmp.ne.s32.totalorder %s145, %s159
      %p161 = scmp.eq.s32.totalorder %s25, 0
      %p162 = por %p160, %p161
      %s164 = sadd.s32 %s163, 1
      %p167 = scmp.eq.s32.totalorder %s19, 1
      %p168 = scmp.ne.s32.totalorder %s163, %s165
      %p169 = scmp.eq.s32.totalorder %s19, 0
      %p170 = por %p168, %p169
      %p171 = scmp.ne.s32.totalorder %s163, %s165
      %p172 = scmp.eq.s32.totalorder %s24, 1
      %p173 = por %p171, %p172
      %p174 = scmp.ne.s32.totalorder %s165, %s166
      %p175 = scmp.eq.s32.totalorder %s24, 0
      %p176 = por %p174, %p175
      %p177 = scmp.ne.s32.totalorder %s165, %s166
      %p178 = scmp.eq.s32.totalorder %s25, 1
      %p179 = por %p177, %p178
      %p181 = scmp.ne.s32.totalorder %s166, %s180
      %p182 = scmp.eq.s32.totalorder %s25, 0
      %p183 = por %p181, %p182
      %s185 = sadd.s32 %s184, 1
      %p188 = scmp.eq.s32.totalorder %s19, 1
      %p189 = scmp.ne.s32.totalorder %s184, %s186
      %p190 = scmp.eq.s32.totalorder %s19, 0
      %p191 = por %p189, %p190
      %p192 = scmp.ne.s32.totalorder %s184, %s186
      %p193 = scmp.eq.s32.totalorder %s24, 1
      %p194 = por %p192, %p193
      %p195 = scmp.ne.s32.totalorder %s186, %s187
      %p196 = scmp.eq.s32.totalorder %s24, 0
      %p197 = por %p195, %p196
      %p198 = scmp.ne.s32.totalorder %s186, %s187
      %p199 = scmp.eq.s32.totalorder %s25, 1
      %p200 = por %p198, %p199
      %p202 = scmp.ne.s32.totalorder %s187, %s201
      %p203 = scmp.eq.s32.totalorder %s25, 0
      %p204 = por %p202, %p203
      %s206 = sadd.s32 %s205, 1
      %p209 = scmp.eq.s32.totalorder %s19, 1
      %p210 = scmp.ne.s32.totalorder %s205, %s207
      %p211 = scmp.eq.s32.totalorder %s19, 0
      %p212 = por %p210, %p211
      %p213 = scmp.ne.s32.totalorder %s205, %s207
      %p214 = scmp.eq.s32.totalorder %s24, 1
      %p215 = por %p213, %p214
      %p216 = scmp.ne.s32.totalorder %s207, %s208
      %p217 = scmp.eq.s32.totalorder %s24, 0
      %p218 = por %p216, %p217
      %p219 = scmp.ne.s32.totalorder %s207, %s208
      %p220 = scmp.eq.s32.totalorder %s25, 1
      %p221 = por %p219, %p220
      %p223 = scmp.ne.s32.totalorder %s208, %s222
      %p224 = scmp.eq.s32.totalorder %s25, 0
      %p225 = por %p223, %p224
      %s227 = sadd.s32 %s226, 1
      %p230 = scmp.eq.s32.totalorder %s19, 1
      %p231 = scmp.ne.s32.totalorder %s226, %s228
      %p232 = scmp.eq.s32.totalorder %s19, 0
      %p233 = por %p231, %p232
      %p234 = scmp.ne.s32.totalorder %s226, %s228
      %p235 = scmp.eq.s32.totalorder %s24, 1
      %p236 = por %p234, %p235
      %p237 = scmp.ne.s32.totalorder %s228, %s229
      %p238 = scmp.eq.s32.totalorder %s24, 0
      %p239 = por %p237, %p238
      %p240 = scmp.ne.s32.totalorder %s228, %s229
      %p241 = scmp.eq.s32.totalorder %s25, 1
      %p242 = por %p240, %p241
      %p244 = scmp.ne.s32.totalorder %s229, %s243
      %p245 = scmp.eq.s32.totalorder %s25, 0
      %p246 = por %p244, %p245
      %s247 = ssub.s32 %s19, %s26
      %p248 = scmp.eq.s32.totalorder %s247, 0
      %s250 = sadd.s32 %s249, 1
      %s251 = scalar_select %p248, %s249, %s250
      %p254 = pneg %p248
      %p255 = scmp.eq.s32.totalorder %s19, 1
      %p256 = por %p254, %p255
      %p257 = scmp.ne.s32.totalorder %s249, %s252
      %p258 = scmp.eq.s32.totalorder %s19, 0
      %p259 = por %p257, %p258
      %p260 = scmp.ne.s32.totalorder %s249, %s252
      %p261 = scmp.eq.s32.totalorder %s24, 1
      %p262 = por %p260, %p261
      %p263 = scmp.ne.s32.totalorder %s252, %s253
      %p264 = scmp.eq.s32.totalorder %s24, 0
      %p265 = por %p263, %p264
      %p266 = scmp.ne.s32.totalorder %s252, %s253
      %p267 = scmp.eq.s32.totalorder %s25, 1
      %p268 = por %p266, %p267
      %p270 = scmp.ne.s32.totalorder %s253, %s269
      %p271 = scmp.eq.s32.totalorder %s25, 0
      %p272 = por %p270, %p271
      %p273 = scmp.le.s32.totalorder 1, %s19
      %p274 = scmp.lt.s32.totalorder %s19, 3
      %p275 = pnand %p273, %p274
      %p276 = pneg %p275
      // Predicated region
      $region9: #{tpu_custom_call.1} parent=5 // pred_check
        _
      $region10: #{tpu_custom_call.1} parent=5 // pred_check_branch
        %278 = sbr.rel (%p275) target = $region12
      $region11: #{tpu_custom_call.1} parent=5 // pred_region
        %s279 = ssub.s32 %s19, 1
        // Predicated region
        $region13: #{tpu_custom_call.1} parent=11 // pred_check
          %p280 = pneg %p92
        $region14: #{tpu_custom_call.1} parent=11 // pred_check_branch
          %282 = sbr.rel (%p280) target = $region16
        $region15: #{tpu_custom_call.1} parent=11 // pred_region
          _
        $region16: #{tpu_custom_call.1} parent=11 // pred_fallthru
          _
        // Predicated region
        $region17: #{tpu_custom_call.1} parent=11 // pred_check
          %p283 = pneg %p113
        $region18: #{tpu_custom_call.1} parent=11 // pred_check_branch
          %285 = sbr.rel (%p283) target = $region20
        $region19: #{tpu_custom_call.1} parent=11 // pred_region
          _
        $region20: #{tpu_custom_call.1} parent=11 // pred_fallthru
          _
        // Predicated region
        $region21: #{tpu_custom_call.1} parent=11 // pred_check
          %p286 = pneg %p134
        $region22: #{tpu_custom_call.1} parent=11 // pred_check_branch
          %288 = sbr.rel (%p286) target = $region24
        $region23: #{tpu_custom_call.1} parent=11 // pred_region
          _
        $region24: #{tpu_custom_call.1} parent=11 // pred_fallthru
          _
        // Predicated region
        $region25: #{tpu_custom_call.1} parent=11 // pred_check
          %p289 = pneg %p155
        $region26: #{tpu_custom_call.1} parent=11 // pred_check_branch
          %291 = sbr.rel (%p289) target = $region28
        $region27: #{tpu_custom_call.1} parent=11 // pred_region
          _
        $region28: #{tpu_custom_call.1} parent=11 // pred_fallthru
          _
        // Predicated region
        $region29: #{tpu_custom_call.1} parent=11 // pred_check
          %p292 = pneg %p176
        $region30: #{tpu_custom_call.1} parent=11 // pred_check_branch
          %294 = sbr.rel (%p292) target = $region32
        $region31: #{tpu_custom_call.1} parent=11 // pred_region
          _
        $region32: #{tpu_custom_call.1} parent=11 // pred_fallthru
          _
        // Predicated region
        $region33: #{tpu_custom_call.1} parent=11 // pred_check
          %p295 = pneg %p197
        $region34: #{tpu_custom_call.1} parent=11 // pred_check_branch
          %297 = sbr.rel (%p295) target = $region36
        $region35: #{tpu_custom_call.1} parent=11 // pred_region
          _
        $region36: #{tpu_custom_call.1} parent=11 // pred_fallthru
          _
        // Predicated region
        $region37: #{tpu_custom_call.1} parent=11 // pred_check
          %p298 = pneg %p218
        $region38: #{tpu_custom_call.1} parent=11 // pred_check_branch
          %300 = sbr.rel (%p298) target = $region40
        $region39: #{tpu_custom_call.1} parent=11 // pred_region
          _
        $region40: #{tpu_custom_call.1} parent=11 // pred_fallthru
          _
        // Predicated region
        $region41: #{tpu_custom_call.1} parent=11 // pred_check
          %p301 = pneg %p239
        $region42: #{tpu_custom_call.1} parent=11 // pred_check_branch
          %303 = sbr.rel (%p301) target = $region44
        $region43: #{tpu_custom_call.1} parent=11 // pred_region
          _
        $region44: #{tpu_custom_call.1} parent=11 // pred_fallthru
          _
      $region12: #{tpu_custom_call.1} parent=5 // pred_fallthru
        _
      %p304 = scmp.lt.s32.totalorder %s19, 2
      // Predicated region
      $region45: #{tpu_custom_call.1} parent=5 // pred_check
        %p305 = pneg %p304
      $region46: #{tpu_custom_call.1} parent=5 // pred_check_branch
        %307 = sbr.rel (%p305) target = $region48
      $region47: #{tpu_custom_call.1} parent=5 // pred_region
        // Predicated region
        $region49: #{tpu_custom_call.1} parent=47 // pred_check
          %p308 = pneg %p39
        $region50: #{tpu_custom_call.1} parent=47 // pred_check_branch
          %310 = sbr.rel (%p308) target = $region52
        $region51: #{tpu_custom_call.1} parent=47 // pred_region
          %s311 = smul.u32 16, %s19
          %p312 = scmp.lt.s32.totalorder %s311, 31
          %s313 = scalar_select %p312, %s311, 31
          %s314 = smul.addr %s313, 8
          %s315 = scalar_lea.vmem %s0, %s314
          %s316 = smul.u32 16, %s19
        $region52: #{tpu_custom_call.1} parent=47 // pred_fallthru
          _
        // Predicated region
        $region53: #{tpu_custom_call.1} parent=47 // pred_check
          %p317 = pneg %p65
        $region54: #{tpu_custom_call.1} parent=47 // pred_check_branch
          %319 = sbr.rel (%p317) target = $region56
        $region55: #{tpu_custom_call.1} parent=47 // pred_region
          %s320 = smul.u32 16, %s19
          %p321 = scmp.lt.s32.totalorder %s320, 31
          %s322 = scalar_select %p321, %s320, 31
          %s323 = smul.addr %s322, 4
          %s324 = scalar_lea.vmem %s1, %s323
          %s325 = smul.u32 16, %s19
        $region56: #{tpu_custom_call.1} parent=47 // pred_fallthru
          _
      $region48: #{tpu_custom_call.1} parent=5 // pred_fallthru
        _
      %p326 = scmp.le.s32.totalorder 1, %s19
      %p327 = scmp.lt.s32.totalorder %s19, 3
      %p328 = pnand %p326, %p327
      %p329 = pneg %p328
      // Predicated region
      $region57: #{tpu_custom_call.1} parent=5 // pred_check
        _
      $region58: #{tpu_custom_call.1} parent=5 // pred_check_branch
        %331 = sbr.rel (%p328) target = $region60
      $region59: #{tpu_custom_call.1} parent=5 // pred_region
        %s332 = ssub.s32 %s19, 1
        %s333 = smul.u32 16, %s24
        %p334 = scmp.lt.s32.totalorder %s333, 31
        %s335 = scalar_select %p334, %s333, 31
        %s336 = smul.addr %s335, 8
        %s337 = scalar_lea.vmem %s0, %s336
        %p338 = pneg %p45
        %p339 = pneg %p42
        %s340 = smul.u32 16, %s24
        %p341 = scmp.lt.s32.totalorder %s340, 31
        %s342 = scalar_select %p341, %s340, 31
        %s343 = smul.addr %s342, 4
        %s344 = scalar_lea.vmem %s1, %s343
        %p345 = pneg %p71
        %p346 = pneg %p68
        %p347 = pneg %p92
        %p348 = pneg %p89
        %p349 = pneg %p113
        %p350 = pneg %p110
        %p351 = pneg %p134
        %p352 = pneg %p131
        %p353 = pneg %p155
        %p354 = pneg %p152
        %p355 = pneg %p176
        %p356 = pneg %p173
        %p357 = pneg %p197
        %p358 = pneg %p194
        %p359 = pneg %p218
        %p360 = pneg %p215
        %p361 = pneg %p239
        %p362 = pneg %p236
        %p363 = pneg %p265
        %p364 = pneg %p262
        %s365 = sand.u32 %s252, 1
        %s366 = scalar_lea.sflag [#allocation3], %s365
        %s367 = sand.u32 %s252, 1
        %s368 = smul.addr %s367, 192
        %s369 = scalar_lea.vmem [#allocation2], %s368
        %s370 = smul.u32 16, %s24
        %p371 = scmp.lt.s32.totalorder %s370, 31
        %s372 = scalar_select %p371, %s370, 31
        %s373 = smul.addr %s372, 8
        %s374 = scalar_lea.vmem %s0, %s373
        %s375 = smul.u32 16, %s24
        %s376 = smul.u32 16, %s24
        %p377 = scmp.lt.s32.totalorder %s376, 31
        %s378 = scalar_select %p377, %s376, 31
        %s379 = smul.addr %s378, 4
        %s380 = scalar_lea.vmem %s1, %s379
        %s381 = smul.u32 16, %s24
        %s382 = smul.u32 16, %s24
        %v384 = vld [vmem:[%s374] sm:$0xff]
        %v385 = vld [vmem:[%s374 + $0x8] sm:$0xff]
        %v386 = vld [vmem:[%s374 + $0x10] sm:$0xff]
        %v387 = vld [vmem:[%s374 + $0x18] sm:$0xff]
        %v388 = vld [vmem:[%s374 + $0x20] sm:$0xff]
        %v389 = vld [vmem:[%s374 + $0x28] sm:$0xff]
        %v390 = vld [vmem:[%s374 + $0x30] sm:$0xff]
        %v391 = vld [vmem:[%s374 + $0x38] sm:$0xff]
        %v392 = vld [vmem:[%s374 + $0x40] sm:$0xff]
        %v393 = vld [vmem:[%s374 + $0x48] sm:$0xff]
        %v394 = vld [vmem:[%s374 + $0x50] sm:$0xff]
        %v395 = vld [vmem:[%s374 + $0x58] sm:$0xff]
        %v396 = vld [vmem:[%s374 + $0x60] sm:$0xff]
        %v397 = vld [vmem:[%s374 + $0x68] sm:$0xff]
        %v398 = vld [vmem:[%s374 + $0x70] sm:$0xff]
        %v399 = vld [vmem:[%s374 + $0x78] sm:$0xff]
        %v400 = vpack.c.bf16 %v385, %v384
        %v401 = vpack.c.bf16 %v387, %v386
        %v402 = vpack.c.bf16 %v389, %v388
        %v403 = vpack.c.bf16 %v391, %v390
        %v404 = vpack.c.bf16 %v393, %v392
        %v405 = vpack.c.bf16 %v395, %v394
        %v406 = vpack.c.bf16 %v397, %v396
        %v407 = vpack.c.bf16 %v399, %v398
        %v408 = vld [vmem:[%s2] sm:$0xf]
        %v409 = vld [vmem:[%s2 + $0x4] sm:$0xf]
        %v410 = vld [vmem:[%s2 + $0x8] sm:$0xf]
        %v411 = vld [vmem:[%s2 + $0xc] sm:$0xf]
        %v412 = vld [vmem:[%s2 + $0x10] sm:$0xf]
        %v413 = vld [vmem:[%s2 + $0x14] sm:$0xf]
        %v414 = vld [vmem:[%s2 + $0x18] sm:$0xf]
        %v415 = vld [vmem:[%s2 + $0x1c] sm:$0xf]
        %v416 = vld [vmem:[%s3] sm:$0x1]
        %v418 = vlaneseq
        %v419 = vshrl.u32 %v418, 7
        %v420 = vsub.s32 0, %v419
        %v421 = vrot.slane %v416, %v420
        %v431 = vunpack.c.l.b16 %v408
        %v432 = vunpack.c.l.b16 %v409
        %v433 = vunpack.c.l.b16 %v410
        %v434 = vunpack.c.l.b16 %v411
        %v435 = vunpack.c.l.b16 %v412
        %v436 = vunpack.c.l.b16 %v413
        %v437 = vunpack.c.l.b16 %v414
        %v438 = vunpack.c.l.b16 %v415
        %v439 = vpack.c.b16 %v432, %v431
        %v440 = vpack.c.b16 %v434, %v433
        %v441 = vpack.c.b16 %v436, %v435
        %v442 = vpack.c.b16 %v438, %v437
        %vm447 = vcmask 523264
        %v449 = vsel %vm447, %v400, 0
        %v452 = vsel %vm447, %v401, 0
        %v455 = vsel %vm447, %v402, 0
        %v458 = vsel %vm447, %v403, 0
        %v461 = vsel %vm447, %v404, 0
        %v464 = vsel %vm447, %v405, 0
        %v467 = vsel %vm447, %v406, 0
        %v470 = vsel %vm447, %v407, 0
        %472 = vmatprep.subr.bf16.mxu0 0
        %473 = vmatpush1.bf16.msra.mxu0 0
        %474 = vmatprep.subr.bf16.mxu0 0
        %475 = vmatpush1.bf16.msra.mxu0 0
        %476 = vmatprep.subr.bf16.mxu0 0
        %477 = vmatpush1.bf16.msra.mxu0 0
        %478 = vmatprep.subr.bf16.mxu0 0
        %479 = vmatpush1.bf16.msra.mxu0 0
        %480 = vmatprep.subr.bf16.mxu0 0
        %481 = vmatpush1.bf16.msra.mxu0 %v442
        %482 = vmatprep.subr.bf16.mxu0 0
        %483 = vmatpush1.bf16.msra.mxu0 %v441
        %484 = vmatprep.subr.bf16.mxu0 0
        %485 = vmatpush1.bf16.msra.mxu0 %v440
        %486 = vmatprep.subr.bf16.mxu0 0
        %487 = vmatpush1.bf16.msra.mxu0 %v439
        %488 = vmatprep.subr.bf16.mxu0 0
        %489 = vmatpush2.bf16.msra.mxu0 0
        %490 = vmatprep.subr.bf16.mxu0 0
        %491 = vmatpush2.bf16.msra.mxu0 0
        %492 = vmatprep.subr.bf16.mxu0 0
        %493 = vmatpush2.bf16.msra.mxu0 0
        %494 = vmatprep.subr.bf16.mxu0 0
        %495 = vmatpush2.bf16.msra.mxu0 0
        %496 = vmatprep.subr.bf16.mxu0 0
        %497 = vmatpush2.bf16.msra.mxu0 0
        %498 = vmatprep.subr.bf16.mxu0 0
        %499 = vmatpush2.bf16.msra.mxu0 0
        %500 = vmatprep.subr.bf16.mxu0 0
        %501 = vmatpush2.bf16.msra.mxu0 0
        %502 = vmatprep.subr.bf16.mxu0 0
        %503 = vmatpush2.bf16.msra.mxu0 0
        %504 = vmatprep.mubr.bf16.mxu0 0
        %505 = vmatmul.mubr.bf16.gmra.mxu0 %v449
        %v506 = vpop.f32.mrf.mxu0
        %v507 = vadd.f32 %v421, %v506
        %v508 = vpop.f32.mrf.mxu0
        %v509 = vpop.f32.mrf.mxu0
        %v510 = vadd.f32 %v421, %v509
        %v511 = vpop.f32.mrf.mxu0
        %512 = vmatprep.mubr.bf16.mxu0 0
        %513 = vmatmul.mubr.bf16.gmra.mxu0 %v452
        %v514 = vpop.f32.mrf.mxu0
        %v515 = vadd.f32 %v421, %v514
        %v516 = vpop.f32.mrf.mxu0
        %v517 = vpop.f32.mrf.mxu0
        %v518 = vadd.f32 %v421, %v517
        %v519 = vpop.f32.mrf.mxu0
        %520 = vmatprep.mubr.bf16.mxu0 0
        %521 = vmatmul.mubr.bf16.gmra.mxu0 %v455
        %v522 = vpop.f32.mrf.mxu0
        %v523 = vadd.f32 %v421, %v522
        %v524 = vpop.f32.mrf.mxu0
        %v525 = vpop.f32.mrf.mxu0
        %v526 = vadd.f32 %v421, %v525
        %v527 = vpop.f32.mrf.mxu0
        %528 = vmatprep.mubr.bf16.mxu0 0
        %529 = vmatmul.mubr.bf16.gmra.mxu0 %v458
        %v530 = vpop.f32.mrf.mxu0
        %v531 = vadd.f32 %v421, %v530
        %v532 = vpop.f32.mrf.mxu0
        %v533 = vpop.f32.mrf.mxu0
        %v534 = vadd.f32 %v421, %v533
        %v535 = vpop.f32.mrf.mxu0
        %536 = vmatprep.mubr.bf16.mxu0 0
        %537 = vmatmul.mubr.bf16.gmra.mxu0 %v461
        %v538 = vpop.f32.mrf.mxu0
        %v539 = vadd.f32 %v421, %v538
        %v540 = vpop.f32.mrf.mxu0
        %v541 = vpop.f32.mrf.mxu0
        %v542 = vadd.f32 %v421, %v541
        %v543 = vpop.f32.mrf.mxu0
        %544 = vmatprep.mubr.bf16.mxu0 0
        %545 = vmatmul.mubr.bf16.gmra.mxu0 %v464
        %v546 = vpop.f32.mrf.mxu0
        %v547 = vadd.f32 %v421, %v546
        %v548 = vpop.f32.mrf.mxu0
        %v549 = vpop.f32.mrf.mxu0
        %v550 = vadd.f32 %v421, %v549
        %v551 = vpop.f32.mrf.mxu0
        %552 = vmatprep.mubr.bf16.mxu0 0
        %553 = vmatmul.mubr.bf16.gmra.mxu0 %v467
        %v554 = vpop.f32.mrf.mxu0
        %v555 = vadd.f32 %v421, %v554
        %v556 = vpop.f32.mrf.mxu0
        %v557 = vpop.f32.mrf.mxu0
        %v558 = vadd.f32 %v421, %v557
        %v559 = vpop.f32.mrf.mxu0
        %560 = vmatprep.mubr.bf16.mxu0 0
        %561 = vmatmul.mubr.bf16.gmra.mxu0 %v470
        %v562 = vpop.f32.mrf.mxu0
        %v563 = vadd.f32 %v421, %v562
        %v564 = vpop.f32.mrf.mxu0
        %v565 = vpop.f32.mrf.mxu0
        %v566 = vadd.f32 %v421, %v565
        %v567 = vpop.f32.mrf.mxu0
        %568 = vdwg.mxu0
        %v569 = vmax.f32 %v507, 0.0
        %v570 = vmax.f32 %v510, 0.0
        %v571 = vmax.f32 %v515, 0.0
        %v572 = vmax.f32 %v518, 0.0
        %v573 = vmax.f32 %v523, 0.0
        %v574 = vmax.f32 %v526, 0.0
        %v575 = vmax.f32 %v531, 0.0
        %v576 = vmax.f32 %v534, 0.0
        %v577 = vmax.f32 %v539, 0.0
        %v578 = vmax.f32 %v542, 0.0
        %v579 = vmax.f32 %v547, 0.0
        %v580 = vmax.f32 %v550, 0.0
        %v581 = vmax.f32 %v555, 0.0
        %v582 = vmax.f32 %v558, 0.0
        %v583 = vmax.f32 %v563, 0.0
        %v584 = vmax.f32 %v566, 0.0
        %v585 = vpack.c.bf16 %v570, %v569
        %v586 = vpack.c.bf16 %v572, %v571
        %v587 = vpack.c.bf16 %v574, %v573
        %v588 = vpack.c.bf16 %v576, %v575
        %v589 = vpack.c.bf16 %v578, %v577
        %v590 = vpack.c.bf16 %v580, %v579
        %v591 = vpack.c.bf16 %v582, %v581
        %v592 = vpack.c.bf16 %v584, %v583
        %v593 = vld [vmem:[%s4] sm:$0xff]
        %v594 = vld [vmem:[%s4 + $0x8] sm:$0xff]
        %v595 = vld [vmem:[%s4 + $0x10] sm:$0xff]
        %v596 = vld [vmem:[%s4 + $0x18] sm:$0xff]
        %v597 = vld [vmem:[%s4 + $0x20] sm:$0xff]
        %v598 = vld [vmem:[%s4 + $0x28] sm:$0xff]
        %v599 = vld [vmem:[%s4 + $0x30] sm:$0xff]
        %v600 = vld [vmem:[%s4 + $0x38] sm:$0xff]
        %v601 = vld [vmem:[%s4 + $0x40] sm:$0xff]
        %v602 = vld [vmem:[%s4 + $0x48] sm:$0xff]
        %v603 = vld [vmem:[%s4 + $0x50] sm:$0xff]
        %v604 = vld [vmem:[%s4 + $0x58] sm:$0xff]
        %v605 = vld [vmem:[%s4 + $0x60] sm:$0xff]
        %v606 = vld [vmem:[%s4 + $0x68] sm:$0xff]
        %v607 = vld [vmem:[%s4 + $0x70] sm:$0xff]
        %v608 = vld [vmem:[%s4 + $0x78] sm:$0xff]
        %v609 = vld [vmem:[%s5] sm:$0x3]
        %v611 = vlaneseq
        %v612 = vshrl.u32 %v611, 7
        %v613 = vsub.s32 0, %v612
        %v614 = vrot.slane %v609, %v613
        %v615 = vlaneseq
        %v616 = vshrl.u32 %v615, 7
        %v617 = vsub.s32 1, %v616
        %v618 = vrot.slane %v609, %v617
        %v637 = vunpack.c.l.b16 %v593
        %v638 = vunpack.c.h.b16 %v593
        %v639 = vunpack.c.l.b16 %v594
        %v640 = vunpack.c.h.b16 %v594
        %v641 = vunpack.c.l.b16 %v595
        %v642 = vunpack.c.h.b16 %v595
        %v643 = vunpack.c.l.b16 %v596
        %v644 = vunpack.c.h.b16 %v596
        %v645 = vunpack.c.l.b16 %v597
        %v646 = vunpack.c.h.b16 %v597
        %v647 = vunpack.c.l.b16 %v598
        %v648 = vunpack.c.h.b16 %v598
        %v649 = vunpack.c.l.b16 %v599
        %v650 = vunpack.c.h.b16 %v599
        %v651 = vunpack.c.l.b16 %v600
        %v652 = vunpack.c.h.b16 %v600
        %v653 = vunpack.c.l.b16 %v601
        %v654 = vunpack.c.h.b16 %v601
        %v655 = vunpack.c.l.b16 %v602
        %v656 = vunpack.c.h.b16 %v602
        %v657 = vunpack.c.l.b16 %v603
        %v658 = vunpack.c.h.b16 %v603
        %v659 = vunpack.c.l.b16 %v604
        %v660 = vunpack.c.h.b16 %v604
        %v661 = vunpack.c.l.b16 %v605
        %v662 = vunpack.c.h.b16 %v605
        %v663 = vunpack.c.l.b16 %v606
        %v664 = vunpack.c.h.b16 %v606
        %v665 = vunpack.c.l.b16 %v607
        %v666 = vunpack.c.h.b16 %v607
        %v667 = vunpack.c.l.b16 %v608
        %v668 = vunpack.c.h.b16 %v608
        %v669 = vpack.c.b16 %v639, %v637
        %v670 = vpack.c.b16 %v640, %v638
        %v671 = vpack.c.b16 %v643, %v641
        %v672 = vpack.c.b16 %v644, %v642
        %v673 = vpack.c.b16 %v647, %v645
        %v674 = vpack.c.b16 %v648, %v646
        %v675 = vpack.c.b16 %v651, %v649
        %v676 = vpack.c.b16 %v652, %v650
        %v677 = vpack.c.b16 %v655, %v653
        %v678 = vpack.c.b16 %v656, %v654
        %v679 = vpack.c.b16 %v659, %v657
        %v680 = vpack.c.b16 %v660, %v658
        %v681 = vpack.c.b16 %v663, %v661
        %v682 = vpack.c.b16 %v664, %v662
        %v683 = vpack.c.b16 %v667, %v665
        %v684 = vpack.c.b16 %v668, %v666
        %701 = vmatprep.subr.bf16.mxu0 %v684
        %702 = vmatpush1.bf16.msra.mxu0 %v683
        %703 = vmatprep.subr.bf16.mxu0 %v682
        %704 = vmatpush1.bf16.msra.mxu0 %v681
        %705 = vmatprep.subr.bf16.mxu0 %v680
        %706 = vmatpush1.bf16.msra.mxu0 %v679
        %707 = vmatprep.subr.bf16.mxu0 %v678
        %708 = vmatpush1.bf16.msra.mxu0 %v677
        %709 = vmatprep.subr.bf16.mxu0 %v676
        %710 = vmatpush1.bf16.msra.mxu0 %v675
        %711 = vmatprep.subr.bf16.mxu0 %v674
        %712 = vmatpush1.bf16.msra.mxu0 %v673
        %713 = vmatprep.subr.bf16.mxu0 %v672
        %714 = vmatpush1.bf16.msra.mxu0 %v671
        %715 = vmatprep.subr.bf16.mxu0 %v670
        %716 = vmatpush1.bf16.msra.mxu0 %v669
        %717 = vmatprep.subr.bf16.mxu0 0
        %718 = vmatpush2.bf16.msra.mxu0 0
        %719 = vmatprep.subr.bf16.mxu0 0
        %720 = vmatpush2.bf16.msra.mxu0 0
        %721 = vmatprep.subr.bf16.mxu0 0
        %722 = vmatpush2.bf16.msra.mxu0 0
        %723 = vmatprep.subr.bf16.mxu0 0
        %724 = vmatpush2.bf16.msra.mxu0 0
        %725 = vmatprep.subr.bf16.mxu0 0
        %726 = vmatpush2.bf16.msra.mxu0 0
        %727 = vmatprep.subr.bf16.mxu0 0
        %728 = vmatpush2.bf16.msra.mxu0 0
        %729 = vmatprep.subr.bf16.mxu0 0
        %730 = vmatpush2.bf16.msra.mxu0 0
        %731 = vmatprep.subr.bf16.mxu0 0
        %732 = vmatpush2.bf16.msra.mxu0 0
        %733 = vmatprep.mubr.bf16.mxu0 0
        %734 = vmatmul.mubr.bf16.gmra.mxu0 %v585
        %v735 = vpop.f32.mrf.mxu0
        %v736 = vadd.f32 %v614, %v735
        %v737 = vpop.f32.mrf.mxu0
        %v738 = vadd.f32 %v618, %v737
        %v739 = vpop.f32.mrf.mxu0
        %v740 = vadd.f32 %v614, %v739
        %v741 = vpop.f32.mrf.mxu0
        %v742 = vadd.f32 %v618, %v741
        %743 = vmatprep.mubr.bf16.mxu0 0
        %744 = vmatmul.mubr.bf16.gmra.mxu0 %v586
        %v745 = vpop.f32.mrf.mxu0
        %v746 = vadd.f32 %v614, %v745
        %v747 = vpop.f32.mrf.mxu0
        %v748 = vadd.f32 %v618, %v747
        %v749 = vpop.f32.mrf.mxu0
        %v750 = vadd.f32 %v614, %v749
        %v751 = vpop.f32.mrf.mxu0
        %v752 = vadd.f32 %v618, %v751
        %753 = vmatprep.mubr.bf16.mxu0 0
        %754 = vmatmul.mubr.bf16.gmra.mxu0 %v587
        %v755 = vpop.f32.mrf.mxu0
        %v756 = vadd.f32 %v614, %v755
        %v757 = vpop.f32.mrf.mxu0
        %v758 = vadd.f32 %v618, %v757
        %v759 = vpop.f32.mrf.mxu0
        %v760 = vadd.f32 %v614, %v759
        %v761 = vpop.f32.mrf.mxu0
        %v762 = vadd.f32 %v618, %v761
        %763 = vmatprep.mubr.bf16.mxu0 0
        %764 = vmatmul.mubr.bf16.gmra.mxu0 %v588
        %v765 = vpop.f32.mrf.mxu0
        %v766 = vadd.f32 %v614, %v765
        %v767 = vpop.f32.mrf.mxu0
        %v768 = vadd.f32 %v618, %v767
        %v769 = vpop.f32.mrf.mxu0
        %v770 = vadd.f32 %v614, %v769
        %v771 = vpop.f32.mrf.mxu0
        %v772 = vadd.f32 %v618, %v771
        %773 = vmatprep.mubr.bf16.mxu0 0
        %774 = vmatmul.mubr.bf16.gmra.mxu0 %v589
        %v775 = vpop.f32.mrf.mxu0
        %v776 = vadd.f32 %v614, %v775
        %v777 = vpop.f32.mrf.mxu0
        %v778 = vadd.f32 %v618, %v777
        %v779 = vpop.f32.mrf.mxu0
        %v780 = vadd.f32 %v614, %v779
        %v781 = vpop.f32.mrf.mxu0
        %v782 = vadd.f32 %v618, %v781
        %783 = vmatprep.mubr.bf16.mxu0 0
        %784 = vmatmul.mubr.bf16.gmra.mxu0 %v590
        %v785 = vpop.f32.mrf.mxu0
        %v786 = vadd.f32 %v614, %v785
        %v787 = vpop.f32.mrf.mxu0
        %v788 = vadd.f32 %v618, %v787
        %v789 = vpop.f32.mrf.mxu0
        %v790 = vadd.f32 %v614, %v789
        %v791 = vpop.f32.mrf.mxu0
        %v792 = vadd.f32 %v618, %v791
        %793 = vmatprep.mubr.bf16.mxu0 0
        %794 = vmatmul.mubr.bf16.gmra.mxu0 %v591
        %v795 = vpop.f32.mrf.mxu0
        %v796 = vadd.f32 %v614, %v795
        %v797 = vpop.f32.mrf.mxu0
        %v798 = vadd.f32 %v618, %v797
        %v799 = vpop.f32.mrf.mxu0
        %v800 = vadd.f32 %v614, %v799
        %v801 = vpop.f32.mrf.mxu0
        %v802 = vadd.f32 %v618, %v801
        %803 = vmatprep.mubr.bf16.mxu0 0
        %804 = vmatmul.mubr.bf16.gmra.mxu0 %v592
        %v805 = vpop.f32.mrf.mxu0
        %v806 = vadd.f32 %v614, %v805
        %v807 = vpop.f32.mrf.mxu0
        %v808 = vadd.f32 %v618, %v807
        %v809 = vpop.f32.mrf.mxu0
        %v810 = vadd.f32 %v614, %v809
        %v811 = vpop.f32.mrf.mxu0
        %v812 = vadd.f32 %v618, %v811
        %813 = vdwg.mxu0
        %v814 = vpack.c.bf16 %v740, %v736
        %v815 = vpack.c.bf16 %v742, %v738
        %v816 = vpack.c.bf16 %v750, %v746
        %v817 = vpack.c.bf16 %v752, %v748
        %v818 = vpack.c.bf16 %v760, %v756
        %v819 = vpack.c.bf16 %v762, %v758
        %v820 = vpack.c.bf16 %v770, %v766
        %v821 = vpack.c.bf16 %v772, %v768
        %v822 = vpack.c.bf16 %v780, %v776
        %v823 = vpack.c.bf16 %v782, %v778
        %v824 = vpack.c.bf16 %v790, %v786
        %v825 = vpack.c.bf16 %v792, %v788
        %v826 = vpack.c.bf16 %v800, %v796
        %v827 = vpack.c.bf16 %v802, %v798
        %v828 = vpack.c.bf16 %v810, %v806
        %v829 = vpack.c.bf16 %v812, %v808
        %v846 = vunpack.c.l.b16 %v814
        %v847 = vunpack.c.l.b16 %v815
        %v848 = vunpack.c.h.b16 %v814
        %v849 = vunpack.c.h.b16 %v815
        %v850 = vunpack.c.l.b16 %v816
        %v851 = vunpack.c.l.b16 %v817
        %v852 = vunpack.c.h.b16 %v816
        %v853 = vunpack.c.h.b16 %v817
        %v854 = vunpack.c.l.b16 %v818
        %v855 = vunpack.c.l.b16 %v819
        %v856 = vunpack.c.h.b16 %v818
        %v857 = vunpack.c.h.b16 %v819
        %v858 = vunpack.c.l.b16 %v820
        %v859 = vunpack.c.l.b16 %v821
        %v860 = vunpack.c.h.b16 %v820
        %v861 = vunpack.c.h.b16 %v821
        %v862 = vunpack.c.l.b16 %v822
        %v863 = vunpack.c.l.b16 %v823
        %v864 = vunpack.c.h.b16 %v822
        %v865 = vunpack.c.h.b16 %v823
        %v866 = vunpack.c.l.b16 %v824
        %v867 = vunpack.c.l.b16 %v825
        %v868 = vunpack.c.h.b16 %v824
        %v869 = vunpack.c.h.b16 %v825
        %v870 = vunpack.c.l.b16 %v826
        %v871 = vunpack.c.l.b16 %v827
        %v872 = vunpack.c.h.b16 %v826
        %v873 = vunpack.c.h.b16 %v827
        %v874 = vunpack.c.l.b16 %v828
        %v875 = vunpack.c.l.b16 %v829
        %v876 = vunpack.c.h.b16 %v828
        %v877 = vunpack.c.h.b16 %v829
        %v878 = vpack.c.b16 %v847, %v846
        %v879 = vpack.c.b16 %v849, %v848
        %v880 = vpack.c.b16 %v851, %v850
        %v881 = vpack.c.b16 %v853, %v852
        %v882 = vpack.c.b16 %v855, %v854
        %v883 = vpack.c.b16 %v857, %v856
        %v884 = vpack.c.b16 %v859, %v858
        %v885 = vpack.c.b16 %v861, %v860
        %v886 = vpack.c.b16 %v863, %v862
        %v887 = vpack.c.b16 %v865, %v864
        %v888 = vpack.c.b16 %v867, %v866
        %v889 = vpack.c.b16 %v869, %v868
        %v890 = vpack.c.b16 %v871, %v870
        %v891 = vpack.c.b16 %v873, %v872
        %v892 = vpack.c.b16 %v875, %v874
        %v893 = vpack.c.b16 %v877, %v876
        %910 = vst [vmem:[%s369 + $0x4] sm:$0xff] %v878
        %911 = vst [vmem:[%s369 + $0x10] sm:$0xff] %v879
        %912 = vst [vmem:[%s369 + $0x1c] sm:$0xff] %v880
        %913 = vst [vmem:[%s369 + $0x28] sm:$0xff] %v881
        %914 = vst [vmem:[%s369 + $0x34] sm:$0xff] %v882
        %915 = vst [vmem:[%s369 + $0x40] sm:$0xff] %v883
        %916 = vst [vmem:[%s369 + $0x4c] sm:$0xff] %v884
        %917 = vst [vmem:[%s369 + $0x58] sm:$0xff] %v885
        %918 = vst [vmem:[%s369 + $0x64] sm:$0xff] %v886
        %919 = vst [vmem:[%s369 + $0x70] sm:$0xff] %v887
        %920 = vst [vmem:[%s369 + $0x7c] sm:$0xff] %v888
        %921 = vst [vmem:[%s369 + $0x88] sm:$0xff] %v889
        %922 = vst [vmem:[%s369 + $0x94] sm:$0xff] %v890
        %923 = vst [vmem:[%s369 + $0xa0] sm:$0xff] %v891
        %924 = vst [vmem:[%s369 + $0xac] sm:$0xff] %v892
        %925 = vst [vmem:[%s369 + $0xb8] sm:$0xff] %v893
        %v926 = vld [vmem:[%s380] sm:$0xf]
        %v927 = vld [vmem:[%s380 + $0x4] sm:$0xf]
        %v928 = vld [vmem:[%s380 + $0x8] sm:$0xf]
        %v929 = vld [vmem:[%s380 + $0xc] sm:$0xf]
        %v930 = vld [vmem:[%s380 + $0x10] sm:$0xf]
        %v931 = vld [vmem:[%s380 + $0x14] sm:$0xf]
        %v932 = vld [vmem:[%s380 + $0x18] sm:$0xf]
        %v933 = vld [vmem:[%s380 + $0x1c] sm:$0xf]
        %v934 = vld [vmem:[%s380 + $0x20] sm:$0xf]
        %v935 = vld [vmem:[%s380 + $0x24] sm:$0xf]
        %v936 = vld [vmem:[%s380 + $0x28] sm:$0xf]
        %v937 = vld [vmem:[%s380 + $0x2c] sm:$0xf]
        %v938 = vld [vmem:[%s380 + $0x30] sm:$0xf]
        %v939 = vld [vmem:[%s380 + $0x34] sm:$0xf]
        %v940 = vld [vmem:[%s380 + $0x38] sm:$0xf]
        %v941 = vld [vmem:[%s380 + $0x3c] sm:$0xf]
        %v942 = vunpack.c.l.bf16 %v926
        %v943 = vunpack.c.l.bf16 %v927
        %v944 = vunpack.c.l.bf16 %v928
        %v945 = vunpack.c.l.bf16 %v929
        %v946 = vunpack.c.l.bf16 %v930
        %v947 = vunpack.c.l.bf16 %v931
        %v948 = vunpack.c.l.bf16 %v932
        %v949 = vunpack.c.l.bf16 %v933
        %v950 = vunpack.c.l.bf16 %v934
        %v951 = vunpack.c.l.bf16 %v935
        %v952 = vunpack.c.l.bf16 %v936
        %v953 = vunpack.c.l.bf16 %v937
        %v954 = vunpack.c.l.bf16 %v938
        %v955 = vunpack.c.l.bf16 %v939
        %v956 = vunpack.c.l.bf16 %v940
        %v957 = vunpack.c.l.bf16 %v941
        %v958 = vmul.f32 %v738, 0.5
        %v959 = vmul.f32 %v742, 0.5
        %v960 = vmul.f32 %v748, 0.5
        %v961 = vmul.f32 %v752, 0.5
        %v962 = vmul.f32 %v758, 0.5
        %v963 = vmul.f32 %v762, 0.5
        %v964 = vmul.f32 %v768, 0.5
        %v965 = vmul.f32 %v772, 0.5
        %v966 = vmul.f32 %v778, 0.5
        %v967 = vmul.f32 %v782, 0.5
        %v968 = vmul.f32 %v788, 0.5
        %v969 = vmul.f32 %v792, 0.5
        %v970 = vmul.f32 %v798, 0.5
        %v971 = vmul.f32 %v802, 0.5
        %v972 = vmul.f32 %v808, 0.5
        %v973 = vmul.f32 %v812, 0.5
        %v974 = vmul.f32 %v958, 1.442695
        %v975 = vpow.pop %v974
        %v976 = vmul.f32 %v959, 1.442695
        %v977 = vpow.pop %v976
        %v978 = vmul.f32 %v960, 1.442695
        %v979 = vpow.pop %v978
        %v980 = vmul.f32 %v961, 1.442695
        %v981 = vpow.pop %v980
        %v982 = vmul.f32 %v962, 1.442695
        %v983 = vpow.pop %v982
        %v984 = vmul.f32 %v963, 1.442695
        %v985 = vpow.pop %v984
        %v986 = vmul.f32 %v964, 1.442695
        %v987 = vpow.pop %v986
        %v988 = vmul.f32 %v965, 1.442695
        %v989 = vpow.pop %v988
        %v990 = vmul.f32 %v966, 1.442695
        %v991 = vpow.pop %v990
        %v992 = vmul.f32 %v967, 1.442695
        %v993 = vpow.pop %v992
        %v994 = vmul.f32 %v968, 1.442695
        %v995 = vpow.pop %v994
        %v996 = vmul.f32 %v969, 1.442695
        %v997 = vpow.pop %v996
        %v998 = vmul.f32 %v970, 1.442695
        %v999 = vpow.pop %v998
        %v1000 = vmul.f32 %v971, 1.442695
        %v1001 = vpow.pop %v1000
        %v1002 = vmul.f32 %v972, 1.442695
        %v1003 = vpow.pop %v1002
        %v1004 = vmul.f32 %v973, 1.442695
        %v1005 = vpow.pop %v1004
        %v1006 = vmul.f32 %v942, %v975
        %v1007 = vmul.f32 %v943, %v977
        %v1008 = vmul.f32 %v944, %v979
        %v1009 = vmul.f32 %v945, %v981
        %v1010 = vmul.f32 %v946, %v983
        %v1011 = vmul.f32 %v947, %v985
        %v1012 = vmul.f32 %v948, %v987
        %v1013 = vmul.f32 %v949, %v989
        %v1014 = vmul.f32 %v950, %v991
        %v1015 = vmul.f32 %v951, %v993
        %v1016 = vmul.f32 %v952, %v995
        %v1017 = vmul.f32 %v953, %v997
        %v1018 = vmul.f32 %v954, %v999
        %v1019 = vmul.f32 %v955, %v1001
        %v1020 = vmul.f32 %v956, %v1003
        %v1021 = vmul.f32 %v957, %v1005
        %v1022 = vadd.f32 %v736, %v1006
        %v1023 = vadd.f32 %v740, %v1007
        %v1024 = vadd.f32 %v746, %v1008
        %v1025 = vadd.f32 %v750, %v1009
        %v1026 = vadd.f32 %v756, %v1010
        %v1027 = vadd.f32 %v760, %v1011
        %v1028 = vadd.f32 %v766, %v1012
        %v1029 = vadd.f32 %v770, %v1013
        %v1030 = vadd.f32 %v776, %v1014
        %v1031 = vadd.f32 %v780, %v1015
        %v1032 = vadd.f32 %v786, %v1016
        %v1033 = vadd.f32 %v790, %v1017
        %v1034 = vadd.f32 %v796, %v1018
        %v1035 = vadd.f32 %v800, %v1019
        %v1036 = vadd.f32 %v806, %v1020
        %v1037 = vadd.f32 %v810, %v1021
        %v1038 = vpack.c.bf16 %v1023, %v1022
        %v1039 = vpack.c.bf16 %v1025, %v1024
        %v1040 = vpack.c.bf16 %v1027, %v1026
        %v1041 = vpack.c.bf16 %v1029, %v1028
        %v1042 = vpack.c.bf16 %v1031, %v1030
        %v1043 = vpack.c.bf16 %v1033, %v1032
        %v1044 = vpack.c.bf16 %v1035, %v1034
        %v1045 = vpack.c.bf16 %v1037, %v1036
        %v1046 = vld [vmem:[%s6] sm:$0xf]
        %v1047 = vld [vmem:[%s6 + $0x4] sm:$0xf]
        %v1048 = vld [vmem:[%s7] sm:$0x1]
        %v1050 = vlaneseq
        %v1051 = vshrl.u32 %v1050, 7
        %v1052 = vsub.s32 0, %v1051
        %v1053 = vrot.slane %v1048, %v1052
        %v1057 = vunpack.c.l.b16 %v1046
        %v1058 = vunpack.c.l.b16 %v1047
        %v1059 = vpack.c.b16 %v1058, %v1057
        %vm1061 = vcmask 130048
        %v1063 = vsel %vm1061, %v1038, 0
        %v1066 = vsel %vm1061, %v1039, 0
        %v1069 = vsel %vm1061, %v1040, 0
        %v1072 = vsel %vm1061, %v1041, 0
        %v1075 = vsel %vm1061, %v1042, 0
        %v1078 = vsel %vm1061, %v1043, 0
        %v1081 = vsel %vm1061, %v1044, 0
        %v1084 = vsel %vm1061, %v1045, 0
        %1086 = vmatprep.subr.bf16.mxu0 0
        %1087 = vmatpush1.bf16.msra.mxu0 0
        %1088 = vmatprep.subr.bf16.mxu0 0
        %1089 = vmatpush1.bf16.msra.mxu0 0
        %1090 = vmatprep.subr.bf16.mxu0 0
        %1091 = vmatpush1.bf16.msra.mxu0 0
        %1092 = vmatprep.subr.bf16.mxu0 0
        %1093 = vmatpush1.bf16.msra.mxu0 0
        %1094 = vmatprep.subr.bf16.mxu0 0
        %1095 = vmatpush1.bf16.msra.mxu0 0
        %1096 = vmatprep.subr.bf16.mxu0 0
        %1097 = vmatpush1.bf16.msra.mxu0 0
        %1098 = vmatprep.subr.bf16.mxu0 0
        %1099 = vmatpush1.bf16.msra.mxu0 0
        %1100 = vmatprep.subr.bf16.mxu0 0
        %1101 = vmatpush1.bf16.msra.mxu0 %v1059
        %1102 = vmatprep.subr.bf16.mxu0 0
        %1103 = vmatpush2.bf16.msra.mxu0 0
        %1104 = vmatprep.subr.bf16.mxu0 0
        %1105 = vmatpush2.bf16.msra.mxu0 0
        %1106 = vmatprep.subr.bf16.mxu0 0
        %1107 = vmatpush2.bf16.msra.mxu0 0
        %1108 = vmatprep.subr.bf16.mxu0 0
        %1109 = vmatpush2.bf16.msra.mxu0 0
        %1110 = vmatprep.subr.bf16.mxu0 0
        %1111 = vmatpush2.bf16.msra.mxu0 0
        %1112 = vmatprep.subr.bf16.mxu0 0
        %1113 = vmatpush2.bf16.msra.mxu0 0
        %1114 = vmatprep.subr.bf16.mxu0 0
        %1115 = vmatpush2.bf16.msra.mxu0 0
        %1116 = vmatprep.subr.bf16.mxu0 0
        %1117 = vmatpush2.bf16.msra.mxu0 0
        %1118 = vmatprep.mubr.bf16.mxu0 0
        %1119 = vmatmul.mubr.bf16.gmra.mxu0 %v1063
        %v1120 = vpop.f32.mrf.mxu0
        %v1121 = vadd.f32 %v1053, %v1120
        %v1122 = vpop.f32.mrf.mxu0
        %v1123 = vpop.f32.mrf.mxu0
        %v1124 = vadd.f32 %v1053, %v1123
        %v1125 = vpop.f32.mrf.mxu0
        %1126 = vmatprep.mubr.bf16.mxu0 0
        %1127 = vmatmul.mubr.bf16.gmra.mxu0 %v1066
        %v1128 = vpop.f32.mrf.mxu0
        %v1129 = vadd.f32 %v1053, %v1128
        %v1130 = vpop.f32.mrf.mxu0
        %v1131 = vpop.f32.mrf.mxu0
        %v1132 = vadd.f32 %v1053, %v1131
        %v1133 = vpop.f32.mrf.mxu0
        %1134 = vmatprep.mubr.bf16.mxu0 0
        %1135 = vmatmul.mubr.bf16.gmra.mxu0 %v1069
        %v1136 = vpop.f32.mrf.mxu0
        %v1137 = vadd.f32 %v1053, %v1136
        %v1138 = vpop.f32.mrf.mxu0
        %v1139 = vpop.f32.mrf.mxu0
        %v1140 = vadd.f32 %v1053, %v1139
        %v1141 = vpop.f32.mrf.mxu0
        %1142 = vmatprep.mubr.bf16.mxu0 0
        %1143 = vmatmul.mubr.bf16.gmra.mxu0 %v1072
        %v1144 = vpop.f32.mrf.mxu0
        %v1145 = vadd.f32 %v1053, %v1144
        %v1146 = vpop.f32.mrf.mxu0
        %v1147 = vpop.f32.mrf.mxu0
        %v1148 = vadd.f32 %v1053, %v1147
        %v1149 = vpop.f32.mrf.mxu0
        %1150 = vmatprep.mubr.bf16.mxu0 0
        %1151 = vmatmul.mubr.bf16.gmra.mxu0 %v1075
        %v1152 = vpop.f32.mrf.mxu0
        %v1153 = vadd.f32 %v1053, %v1152
        %v1154 = vpop.f32.mrf.mxu0
        %v1155 = vpop.f32.mrf.mxu0
        %v1156 = vadd.f32 %v1053, %v1155
        %v1157 = vpop.f32.mrf.mxu0
        %1158 = vmatprep.mubr.bf16.mxu0 0
        %1159 = vmatmul.mubr.bf16.gmra.mxu0 %v1078
        %v1160 = vpop.f32.mrf.mxu0
        %v1161 = vadd.f32 %v1053, %v1160
        %v1162 = vpop.f32.mrf.mxu0
        %v1163 = vpop.f32.mrf.mxu0
        %v1164 = vadd.f32 %v1053, %v1163
        %v1165 = vpop.f32.mrf.mxu0
        %1166 = vmatprep.mubr.bf16.mxu0 0
        %1167 = vmatmul.mubr.bf16.gmra.mxu0 %v1081
        %v1168 = vpop.f32.mrf.mxu0
        %v1169 = vadd.f32 %v1053, %v1168
        %v1170 = vpop.f32.mrf.mxu0
        %v1171 = vpop.f32.mrf.mxu0
        %v1172 = vadd.f32 %v1053, %v1171
        %v1173 = vpop.f32.mrf.mxu0
        %1174 = vmatprep.mubr.bf16.mxu0 0
        %1175 = vmatmul.mubr.bf16.gmra.mxu0 %v1084
        %v1176 = vpop.f32.mrf.mxu0
        %v1177 = vadd.f32 %v1053, %v1176
        %v1178 = vpop.f32.mrf.mxu0
        %v1179 = vpop.f32.mrf.mxu0
        %v1180 = vadd.f32 %v1053, %v1179
        %v1181 = vpop.f32.mrf.mxu0
        %1182 = vdwg.mxu0
        %v1183 = vmax.f32 %v1121, 0.0
        %v1184 = vmax.f32 %v1124, 0.0
        %v1185 = vmax.f32 %v1129, 0.0
        %v1186 = vmax.f32 %v1132, 0.0
        %v1187 = vmax.f32 %v1137, 0.0
        %v1188 = vmax.f32 %v1140, 0.0
        %v1189 = vmax.f32 %v1145, 0.0
        %v1190 = vmax.f32 %v1148, 0.0
        %v1191 = vmax.f32 %v1153, 0.0
        %v1192 = vmax.f32 %v1156, 0.0
        %v1193 = vmax.f32 %v1161, 0.0
        %v1194 = vmax.f32 %v1164, 0.0
        %v1195 = vmax.f32 %v1169, 0.0
        %v1196 = vmax.f32 %v1172, 0.0
        %v1197 = vmax.f32 %v1177, 0.0
        %v1198 = vmax.f32 %v1180, 0.0
        %v1199 = vpack.c.bf16 %v1184, %v1183
        %v1200 = vpack.c.bf16 %v1186, %v1185
        %v1201 = vpack.c.bf16 %v1188, %v1187
        %v1202 = vpack.c.bf16 %v1190, %v1189
        %v1203 = vpack.c.bf16 %v1192, %v1191
        %v1204 = vpack.c.bf16 %v1194, %v1193
        %v1205 = vpack.c.bf16 %v1196, %v1195
        %v1206 = vpack.c.bf16 %v1198, %v1197
        %v1207 = vld [vmem:[%s8] sm:$0xf]
        %v1208 = vld [vmem:[%s8 + $0x4] sm:$0xf]
        %v1209 = vld [vmem:[%s8 + $0x8] sm:$0xf]
        %v1210 = vld [vmem:[%s8 + $0xc] sm:$0xf]
        %v1211 = vld [vmem:[%s8 + $0x10] sm:$0xf]
        %v1212 = vld [vmem:[%s8 + $0x14] sm:$0xf]
        %v1213 = vld [vmem:[%s8 + $0x18] sm:$0xf]
        %v1214 = vld [vmem:[%s8 + $0x1c] sm:$0xf]
        %v1215 = vld [vmem:[%s8 + $0x20] sm:$0xf]
        %v1216 = vld [vmem:[%s8 + $0x24] sm:$0xf]
        %v1217 = vld [vmem:[%s8 + $0x28] sm:$0xf]
        %v1218 = vld [vmem:[%s8 + $0x2c] sm:$0xf]
        %v1219 = vld [vmem:[%s8 + $0x30] sm:$0xf]
        %v1220 = vld [vmem:[%s8 + $0x34] sm:$0xf]
        %v1221 = vld [vmem:[%s8 + $0x38] sm:$0xf]
        %v1222 = vld [vmem:[%s8 + $0x3c] sm:$0xf]
        %v1223 = vld [vmem:[%s9] sm:$0x1]
        %v1225 = vlaneseq
        %v1226 = vshrl.u32 %v1225, 7
        %v1227 = vsub.s32 0, %v1226
        %v1228 = vrot.slane %v1223, %v1227
        %v1246 = vunpack.c.l.b16 %v1207
        %v1247 = vunpack.c.l.b16 %v1208
        %v1248 = vunpack.c.l.b16 %v1209
        %v1249 = vunpack.c.l.b16 %v1210
        %v1250 = vunpack.c.l.b16 %v1211
        %v1251 = vunpack.c.l.b16 %v1212
        %v1252 = vunpack.c.l.b16 %v1213
        %v1253 = vunpack.c.l.b16 %v1214
        %v1254 = vunpack.c.l.b16 %v1215
        %v1255 = vunpack.c.l.b16 %v1216
        %v1256 = vunpack.c.l.b16 %v1217
        %v1257 = vunpack.c.l.b16 %v1218
        %v1258 = vunpack.c.l.b16 %v1219
        %v1259 = vunpack.c.l.b16 %v1220
        %v1260 = vunpack.c.l.b16 %v1221
        %v1261 = vunpack.c.l.b16 %v1222
        %v1262 = vpack.c.b16 %v1247, %v1246
        %v1263 = vpack.c.b16 %v1249, %v1248
        %v1264 = vpack.c.b16 %v1251, %v1250
        %v1265 = vpack.c.b16 %v1253, %v1252
        %v1266 = vpack.c.b16 %v1255, %v1254
        %v1267 = vpack.c.b16 %v1257, %v1256
        %v1268 = vpack.c.b16 %v1259, %v1258
        %v1269 = vpack.c.b16 %v1261, %v1260
        %1278 = vmatprep.subr.bf16.mxu0 0
        %1279 = vmatpush1.bf16.msra.mxu0 %v1269
        %1280 = vmatprep.subr.bf16.mxu0 0
        %1281 = vmatpush1.bf16.msra.mxu0 %v1268
        %1282 = vmatprep.subr.bf16.mxu0 0
        %1283 = vmatpush1.bf16.msra.mxu0 %v1267
        %1284 = vmatprep.subr.bf16.mxu0 0
        %1285 = vmatpush1.bf16.msra.mxu0 %v1266
        %1286 = vmatprep.subr.bf16.mxu0 0
        %1287 = vmatpush1.bf16.msra.mxu0 %v1265
        %1288 = vmatprep.subr.bf16.mxu0 0
        %1289 = vmatpush1.bf16.msra.mxu0 %v1264
        %1290 = vmatprep.subr.bf16.mxu0 0
        %1291 = vmatpush1.bf16.msra.mxu0 %v1263
        %1292 = vmatprep.subr.bf16.mxu0 0
        %1293 = vmatpush1.bf16.msra.mxu0 %v1262
        %1294 = vmatprep.subr.bf16.mxu0 0
        %1295 = vmatpush2.bf16.msra.mxu0 0
        %1296 = vmatprep.subr.bf16.mxu0 0
        %1297 = vmatpush2.bf16.msra.mxu0 0
        %1298 = vmatprep.subr.bf16.mxu0 0
        %1299 = vmatpush2.bf16.msra.mxu0 0
        %1300 = vmatprep.subr.bf16.mxu0 0
        %1301 = vmatpush2.bf16.msra.mxu0 0
        %1302 = vmatprep.subr.bf16.mxu0 0
        %1303 = vmatpush2.bf16.msra.mxu0 0
        %1304 = vmatprep.subr.bf16.mxu0 0
        %1305 = vmatpush2.bf16.msra.mxu0 0
        %1306 = vmatprep.subr.bf16.mxu0 0
        %1307 = vmatpush2.bf16.msra.mxu0 0
        %1308 = vmatprep.subr.bf16.mxu0 0
        %1309 = vmatpush2.bf16.msra.mxu0 0
        %1310 = vmatprep.mubr.bf16.mxu0 0
        %1311 = vmatmul.mubr.bf16.gmra.mxu0 %v1199
        %v1312 = vpop.f32.mrf.mxu0
        %v1313 = vadd.f32 %v1228, %v1312
        %v1314 = vpop.f32.mrf.mxu0
        %v1315 = vpop.f32.mrf.mxu0
        %v1316 = vadd.f32 %v1228, %v1315
        %v1317 = vpop.f32.mrf.mxu0
        %1318 = vmatprep.mubr.bf16.mxu0 0
        %1319 = vmatmul.mubr.bf16.gmra.mxu0 %v1200
        %v1320 = vpop.f32.mrf.mxu0
        %v1321 = vadd.f32 %v1228, %v1320
        %v1322 = vpop.f32.mrf.mxu0
        %v1323 = vpop.f32.mrf.mxu0
        %v1324 = vadd.f32 %v1228, %v1323
        %v1325 = vpop.f32.mrf.mxu0
        %1326 = vmatprep.mubr.bf16.mxu0 0
        %1327 = vmatmul.mubr.bf16.gmra.mxu0 %v1201
        %v1328 = vpop.f32.mrf.mxu0
        %v1329 = vadd.f32 %v1228, %v1328
        %v1330 = vpop.f32.mrf.mxu0
        %v1331 = vpop.f32.mrf.mxu0
        %v1332 = vadd.f32 %v1228, %v1331
        %v1333 = vpop.f32.mrf.mxu0
        %1334 = vmatprep.mubr.bf16.mxu0 0
        %1335 = vmatmul.mubr.bf16.gmra.mxu0 %v1202
        %v1336 = vpop.f32.mrf.mxu0
        %v1337 = vadd.f32 %v1228, %v1336
        %v1338 = vpop.f32.mrf.mxu0
        %v1339 = vpop.f32.mrf.mxu0
        %v1340 = vadd.f32 %v1228, %v1339
        %v1341 = vpop.f32.mrf.mxu0
        %1342 = vmatprep.mubr.bf16.mxu0 0
        %1343 = vmatmul.mubr.bf16.gmra.mxu0 %v1203
        %v1344 = vpop.f32.mrf.mxu0
        %v1345 = vadd.f32 %v1228, %v1344
        %v1346 = vpop.f32.mrf.mxu0
        %v1347 = vpop.f32.mrf.mxu0
        %v1348 = vadd.f32 %v1228, %v1347
        %v1349 = vpop.f32.mrf.mxu0
        %1350 = vmatprep.mubr.bf16.mxu0 0
        %1351 = vmatmul.mubr.bf16.gmra.mxu0 %v1204
        %v1352 = vpop.f32.mrf.mxu0
        %v1353 = vadd.f32 %v1228, %v1352
        %v1354 = vpop.f32.mrf.mxu0
        %v1355 = vpop.f32.mrf.mxu0
        %v1356 = vadd.f32 %v1228, %v1355
        %v1357 = vpop.f32.mrf.mxu0
        %1358 = vmatprep.mubr.bf16.mxu0 0
        %1359 = vmatmul.mubr.bf16.gmra.mxu0 %v1205
        %v1360 = vpop.f32.mrf.mxu0
        %v1361 = vadd.f32 %v1228, %v1360
        %v1362 = vpop.f32.mrf.mxu0
        %v1363 = vpop.f32.mrf.mxu0
        %v1364 = vadd.f32 %v1228, %v1363
        %v1365 = vpop.f32.mrf.mxu0
        %1366 = vmatprep.mubr.bf16.mxu0 0
        %1367 = vmatmul.mubr.bf16.gmra.mxu0 %v1206
        %v1368 = vpop.f32.mrf.mxu0
        %v1369 = vadd.f32 %v1228, %v1368
        %v1370 = vpop.f32.mrf.mxu0
        %v1371 = vpop.f32.mrf.mxu0
        %v1372 = vadd.f32 %v1228, %v1371
        %v1373 = vpop.f32.mrf.mxu0
        %1374 = vdwg.mxu0
        %v1375 = vpack.c.bf16 %v1316, %v1313
        %v1376 = vpack.c.bf16 %v1324, %v1321
        %v1377 = vpack.c.bf16 %v1332, %v1329
        %v1378 = vpack.c.bf16 %v1340, %v1337
        %v1379 = vpack.c.bf16 %v1348, %v1345
        %v1380 = vpack.c.bf16 %v1356, %v1353
        %v1381 = vpack.c.bf16 %v1364, %v1361
        %v1382 = vpack.c.bf16 %v1372, %v1369
        %v1391 = vunpack.c.l.b16 %v1375
        %v1392 = vunpack.c.h.b16 %v1375
        %v1393 = vunpack.c.l.b16 %v1376
        %v1394 = vunpack.c.h.b16 %v1376
        %v1395 = vunpack.c.l.b16 %v1377
        %v1396 = vunpack.c.h.b16 %v1377
        %v1397 = vunpack.c.l.b16 %v1378
        %v1398 = vunpack.c.h.b16 %v1378
        %v1399 = vunpack.c.l.b16 %v1379
        %v1400 = vunpack.c.h.b16 %v1379
        %v1401 = vunpack.c.l.b16 %v1380
        %v1402 = vunpack.c.h.b16 %v1380
        %v1403 = vunpack.c.l.b16 %v1381
        %v1404 = vunpack.c.h.b16 %v1381
        %v1405 = vunpack.c.l.b16 %v1382
        %v1406 = vunpack.c.h.b16 %v1382
        %v1407 = vpack.c.b16 %v1391, %v1391
        %v1408 = vpack.c.b16 %v1392, %v1392
        %v1409 = vpack.c.b16 %v1393, %v1393
        %v1410 = vpack.c.b16 %v1394, %v1394
        %v1411 = vpack.c.b16 %v1395, %v1395
        %v1412 = vpack.c.b16 %v1396, %v1396
        %v1413 = vpack.c.b16 %v1397, %v1397
        %v1414 = vpack.c.b16 %v1398, %v1398
        %v1415 = vpack.c.b16 %v1399, %v1399
        %v1416 = vpack.c.b16 %v1400, %v1400
        %v1417 = vpack.c.b16 %v1401, %v1401
        %v1418 = vpack.c.b16 %v1402, %v1402
        %v1419 = vpack.c.b16 %v1403, %v1403
        %v1420 = vpack.c.b16 %v1404, %v1404
        %v1421 = vpack.c.b16 %v1405, %v1405
        %v1422 = vpack.c.b16 %v1406, %v1406
        %1439 = vst [vmem:[%s369] sm:$0xf] %v1407
        %1440 = vst [vmem:[%s369 + $0xc] sm:$0xf] %v1408
        %1441 = vst [vmem:[%s369 + $0x18] sm:$0xf] %v1409
        %1442 = vst [vmem:[%s369 + $0x24] sm:$0xf] %v1410
        %1443 = vst [vmem:[%s369 + $0x30] sm:$0xf] %v1411
        %1444 = vst [vmem:[%s369 + $0x3c] sm:$0xf] %v1412
        %1445 = vst [vmem:[%s369 + $0x48] sm:$0xf] %v1413
        %1446 = vst [vmem:[%s369 + $0x54] sm:$0xf] %v1414
        %1447 = vst [vmem:[%s369 + $0x60] sm:$0xf] %v1415
        %1448 = vst [vmem:[%s369 + $0x6c] sm:$0xf] %v1416
        %1449 = vst [vmem:[%s369 + $0x78] sm:$0xf] %v1417
        %1450 = vst [vmem:[%s369 + $0x84] sm:$0xf] %v1418
        %1451 = vst [vmem:[%s369 + $0x90] sm:$0xf] %v1419
        %1452 = vst [vmem:[%s369 + $0x9c] sm:$0xf] %v1420
        %1453 = vst [vmem:[%s369 + $0xa8] sm:$0xf] %v1421
        %1454 = vst [vmem:[%s369 + $0xb4] sm:$0xf] %v1422
        %s1455 = sand.u32 %s252, 1
        %s1456 = scalar_lea.sflag [#allocation3], %s1455
        %s1457 = sand.u32 %s252, 1
        %s1458 = smul.addr %s1457, 192
        %s1459 = scalar_lea.vmem [#allocation2], %s1458
        // Predicated region
        $region61: #{tpu_custom_call.1} parent=59 // pred_check
          %p1460 = pneg %p262
        $region62: #{tpu_custom_call.1} parent=59 // pred_check_branch
          %1462 = sbr.rel (%p1460) target = $region64
        $region63: #{tpu_custom_call.1} parent=59 // pred_region
          %s1463 = smul.u32 16, %s24
          %s1465 = ssub.s32 3072, 3072
          %1466 = vsyncadd %s1456, %s1465
          %s1467 = smul.addr %s1463, 3
          %s1468 = smul.addr %s1467, 64
          %s1469 = scalar_lea.hbm %s10, %s1468
          %s1470 = sshll.u32 %s1459, 4
          %s1471 = int_to_ptr.vmem [resolvable:$true] %s1470
          %1476 = dma.vmem_to_hbm [thread:$0]  %s1471, 3072, %s1469, %s1456, 192, 192, 12
        $region64: #{tpu_custom_call.1} parent=59 // pred_fallthru
          _
      $region60: #{tpu_custom_call.1} parent=5 // pred_fallthru
        _
      %p1477 = scmp.le.s32.totalorder 2, %s19
      // Predicated region
      $region65: #{tpu_custom_call.1} parent=5 // pred_check
        %p1478 = pneg %p1477
      $region66: #{tpu_custom_call.1} parent=5 // pred_check_branch
        %1480 = sbr.rel (%p1478) target = $region68
      $region67: #{tpu_custom_call.1} parent=5 // pred_region
        %s1481 = ssub.s32 %s19, 2
        // Predicated region
        $region69: #{tpu_custom_call.1} parent=67 // pred_check
          %p1482 = pneg %p268
        $region70: #{tpu_custom_call.1} parent=67 // pred_check_branch
          %1484 = sbr.rel (%p1482) target = $region72
        $region71: #{tpu_custom_call.1} parent=67 // pred_region
          %s1485 = sand.u32 %s253, 1
          %s1486 = scalar_lea.sflag [#allocation3], %s1485
          %s1487 = sand.u32 %s253, 1
          %s1488 = smul.addr %s1487, 192
          %s1489 = scalar_lea.vmem [#allocation2], %s1488
          %1490 = dma.done %s1486, 3072
        $region72: #{tpu_custom_call.1} parent=67 // pred_fallthru
          _
      $region68: #{tpu_custom_call.1} parent=5 // pred_fallthru
        _
    $region6: #{tpu_custom_call.1} parent=1 // loop_footer
      %s23 = sadd.s32 1, %s19
    $region7: #{tpu_custom_call.1} parent=1 // loop_footer_branch
      %18 = sbr.rel target = $region3
    $region8: #{tpu_custom_call.1} parent=1 // loop_exit
      _
    %1491 = vsyncpa [#allocation3], 1
    %s1492 = scalar_lea.sflag [#allocation3], 1
    %1493 = vsyncpa %s1492, 1

// kernel: tpu_custom_call.1
$region0: #{tpu_custom_call.1}
  #allocation0 [shape = 'u32[]', space=smem, size = 0x4, offset = 0x4, fixed_abs, tag = 'smem constant byte address 0x4 - core index']
  #allocation1 [shape = 'u32[144,128]{1,0:T(1,128)}', space=vmem, size = 0x12000, scoped, tag = 'internal scratch']
  %s0 = inlined_call_operand.vmem [shape: f32[256,64], index: 0, kind: input, shape index: {}]
  %s1 = inlined_call_operand.vmem [shape: bf16[256,16], index: 1, kind: input, shape index: {}]
  %s2 = inlined_call_operand.vmem [shape: bf16[64,128], index: 2, kind: input, shape index: {}]
  %s3 = inlined_call_operand.vmem [shape: f32[1,128], index: 3, kind: input, shape index: {}]
  %s4 = inlined_call_operand.vmem [shape: bf16[128,256], index: 4, kind: input, shape index: {}]
  %s5 = inlined_call_operand.vmem [shape: f32[1,256], index: 5, kind: input, shape index: {}]
  %s6 = inlined_call_operand.vmem [shape: bf16[16,128], index: 6, kind: input, shape index: {}]
  %s7 = inlined_call_operand.vmem [shape: f32[1,128], index: 7, kind: input, shape index: {}]
  %s8 = inlined_call_operand.vmem [shape: bf16[128,128], index: 8, kind: input, shape index: {}]
  %s9 = inlined_call_operand.vmem [shape: f32[1,128], index: 9, kind: input, shape index: {}]
  %s10 = inlined_call_operand.hbm [shape: bf16[256,384], index: 10, kind: output, shape index: {}]
  %s11 = sld [smem:[#allocation0]]
  $region73: #{tpu_custom_call.1} parent=0
    _
  %s13 = ssub.s32 1, %s11
  %s14 = scalar_select 0, %s13, %s11
  $region1: #{tpu_custom_call.1} parent=0
    #allocation2 [shape = 'u8[196608]{0}', space=vmem, size = 0x30000, scoped, tag = 'output window, operand 0']
    #allocation3 [shape = 's32[2]{0}', space=sflag, size = 0x8, scoped, tag = 'scoped memory for tpu_custom_call.1']
    %15 = vsyncpa [#allocation3], 0
    %s16 = scalar_lea.sflag [#allocation3], 1
    %17 = vsyncpa %s16, 0
    loop: start=0, step=1, limit=4
    $region2: #{tpu_custom_call.1} parent=1 // loop_pre_header
      _
    $region3: #{tpu_custom_call.1} parent=1 // loop_header
      %s19 = sphi 0, %s23
      %p20 = scmp.ge.s32.totalorder %s19, 4
      %s29 = sphi 0, %s31
      %s32 = sphi 0, %s29
      %s33 = sphi 0, %s32
      %s49 = sphi 0, %s33
      %s55 = sphi 0, %s57
      %s58 = sphi 0, %s55
      %s59 = sphi 0, %s58
      %s75 = sphi 0, %s59
      %s79 = sphi 0, %s79
      %s81 = sphi 0, %s79
      %s82 = sphi 0, %s81
      %s96 = sphi 0, %s82
      %s100 = sphi 0, %s100
      %s102 = sphi 0, %s100
      %s103 = sphi 0, %s102
      %s117 = sphi 0, %s103
      %s121 = sphi 0, %s121
      %s123 = sphi 0, %s121
      %s124 = sphi 0, %s123
      %s138 = sphi 0, %s124
      %s142 = sphi 0, %s142
      %s144 = sphi 0, %s142
      %s145 = sphi 0, %s144
      %s159 = sphi 0, %s145
      %s163 = sphi 0, %s163
      %s165 = sphi 0, %s163
      %s166 = sphi 0, %s165
      %s180 = sphi 0, %s166
      %s184 = sphi 0, %s184
      %s186 = sphi 0, %s184
      %s187 = sphi 0, %s186
      %s201 = sphi 0, %s187
      %s205 = sphi 0, %s205
      %s207 = sphi 0, %s205
      %s208 = sphi 0, %s207
      %s222 = sphi 0, %s208
      %s226 = sphi 0, %s226
      %s228 = sphi 0, %s226
      %s229 = sphi 0, %s228
      %s243 = sphi 0, %s229
      %s249 = sphi 0, %s251
      %s252 = sphi 0, %s249
      %s253 = sphi 0, %s252
      %s269 = sphi 0, %s253
    $region4: #{tpu_custom_call.1} parent=1 // loop_header_branch
      %22 = sbr.rel (%p20) target = $region8
    $region5: #{tpu_custom_call.1} parent=1 // loop_body
      %s24 = ssub.s32 %s19, 1
      %s25 = ssub.s32 %s19, 2
      %s26 = sadd.s32 %s19, 1
      %s27 = ssub.s32 %s19, %s26
      %p28 = scmp.eq.s32.totalorder %s27, 0
      %s30 = sadd.s32 %s29, 1
      %s31 = scalar_select %p28, %s29, %s30
      %p34 = pneg %p28
      %p35 = scmp.eq.s32.totalorder %s19, 1
      %p36 = por %p34, %p35
      %p37 = scmp.ne.s32.totalorder %s29, %s32
      %p38 = scmp.eq.s32.totalorder %s19, 0
      %p39 = por %p37, %p38
      %p40 = scmp.ne.s32.totalorder %s29, %s32
      %p41 = scmp.eq.s32.totalorder %s24, 1
      %p42 = por %p40, %p41
      %p43 = scmp.ne.s32.totalorder %s32, %s33
      %p44 = scmp.eq.s32.totalorder %s24, 0
      %p45 = por %p43, %p44
      %p46 = scmp.ne.s32.totalorder %s32, %s33
      %p47 = scmp.eq.s32.totalorder %s25, 1
      %p48 = por %p46, %p47
      %p50 = scmp.ne.s32.totalorder %s33, %s49
      %p51 = scmp.eq.s32.totalorder %s25, 0
      %p52 = por %p50, %p51
      %s53 = ssub.s32 %s19, %s26
      %p54 = scmp.eq.s32.totalorder %s53, 0
      %s56 = sadd.s32 %s55, 1
      %s57 = scalar_select %p54, %s55, %s56
      %p60 = pneg %p54
      %p61 = scmp.eq.s32.totalorder %s19, 1
      %p62 = por %p60, %p61
      %p63 = scmp.ne.s32.totalorder %s55, %s58
      %p64 = scmp.eq.s32.totalorder %s19, 0
      %p65 = por %p63, %p64
      %p66 = scmp.ne.s32.totalorder %s55, %s58
      %p67 = scmp.eq.s32.totalorder %s24, 1
      %p68 = por %p66, %p67
      %p69 = scmp.ne.s32.totalorder %s58, %s59
      %p70 = scmp.eq.s32.totalorder %s24, 0
      %p71 = por %p69, %p70
      %p72 = scmp.ne.s32.totalorder %s58, %s59
      %p73 = scmp.eq.s32.totalorder %s25, 1
      %p74 = por %p72, %p73
      %p76 = scmp.ne.s32.totalorder %s59, %s75
      %p77 = scmp.eq.s32.totalorder %s25, 0
      %p78 = por %p76, %p77
      %s80 = sadd.s32 %s79, 1
      %p83 = scmp.eq.s32.totalorder %s19, 1
      %p84 = scmp.ne.s32.totalorder %s79, %s81
      %p85 = scmp.eq.s32.totalorder %s19, 0
      %p86 = por %p84, %p85
      %p87 = scmp.ne.s32.totalorder %s79, %s81
      %p88 = scmp.eq.s32.totalorder %s24, 1
      %p89 = por %p87, %p88
      %p90 = scmp.ne.s32.totalorder %s81, %s82
      %p91 = scmp.eq.s32.totalorder %s24, 0
      %p92 = por %p90, %p91
      %p93 = scmp.ne.s32.totalorder %s81, %s82
      %p94 = scmp.eq.s32.totalorder %s25, 1
      %p95 = por %p93, %p94
      %p97 = scmp.ne.s32.totalorder %s82, %s96
      %p98 = scmp.eq.s32.totalorder %s25, 0
      %p99 = por %p97, %p98
      %s101 = sadd.s32 %s100, 1
      %p104 = scmp.eq.s32.totalorder %s19, 1
      %p105 = scmp.ne.s32.totalorder %s100, %s102
      %p106 = scmp.eq.s32.totalorder %s19, 0
      %p107 = por %p105, %p106
      %p108 = scmp.ne.s32.totalorder %s100, %s102
      %p109 = scmp.eq.s32.totalorder %s24, 1
      %p110 = por %p108, %p109
      %p111 = scmp.ne.s32.totalorder %s102, %s103
      %p112 = scmp.eq.s32.totalorder %s24, 0
      %p113 = por %p111, %p112
      %p114 = scmp.ne.s32.totalorder %s102, %s103
      %p115 = scmp.eq.s32.totalorder %s25, 1
      %p116 = por %p114, %p115
      %p118 = scmp.ne.s32.totalorder %s103, %s117
      %p119 = scmp.eq.s32.totalorder %s25, 0
      %p120 = por %p118, %p119
      %s122 = sadd.s32 %s121, 1
      %p125 = scmp.eq.s32.totalorder %s19, 1
      %p126 = scmp.ne.s32.totalorder %s121, %s123
      %p127 = scmp.eq.s32.totalorder %s19, 0
      %p128 = por %p126, %p127
      %p129 = scmp.ne.s32.totalorder %s121, %s123
      %p130 = scmp.eq.s32.totalorder %s24, 1
      %p131 = por %p129, %p130
      %p132 = scmp.ne.s32.totalorder %s123, %s124
      %p133 = scmp.eq.s32.totalorder %s24, 0
      %p134 = por %p132, %p133
      %p135 = scmp.ne.s32.totalorder %s123, %s124
      %p136 = scmp.eq.s32.totalorder %s25, 1
      %p137 = por %p135, %p136
      %p139 = scmp.ne.s32.totalorder %s124, %s138
      %p140 = scmp.eq.s32.totalorder %s25, 0
      %p141 = por %p139, %p140
      %s143 = sadd.s32 %s142, 1
      %p146 = scmp.eq.s32.totalorder %s19, 1
      %p147 = scmp.ne.s32.totalorder %s142, %s144
      %p148 = scmp.eq.s32.totalorder %s19, 0
      %p149 = por %p147, %p148
      %p150 = scmp.ne.s32.totalorder %s142, %s144
      %p151 = scmp.eq.s32.totalorder %s24, 1
      %p152 = por %p150, %p151
      %p153 = scmp.ne.s32.totalorder %s144, %s145
      %p154 = scmp.eq.s32.totalorder %s24, 0
      %p155 = por %p153, %p154
      %p156 = scmp.ne.s32.totalorder %s144, %s145
      %p157 = scmp.eq.s32.totalorder %s25, 1
      %p158 = por %p156, %p157
      %p160 = scmp.ne.s32.totalorder %s145, %s159
      %p161 = scmp.eq.s32.totalorder %s25, 0
      %p162 = por %p160, %p161
      %s164 = sadd.s32 %s163, 1
      %p167 = scmp.eq.s32.totalorder %s19, 1
      %p168 = scmp.ne.s32.totalorder %s163, %s165
      %p169 = scmp.eq.s32.totalorder %s19, 0
      %p170 = por %p168, %p169
      %p171 = scmp.ne.s32.totalorder %s163, %s165
      %p172 = scmp.eq.s32.totalorder %s24, 1
      %p173 = por %p171, %p172
      %p174 = scmp.ne.s32.totalorder %s165, %s166
      %p175 = scmp.eq.s32.totalorder %s24, 0
      %p176 = por %p174, %p175
      %p177 = scmp.ne.s32.totalorder %s165, %s166
      %p178 = scmp.eq.s32.totalorder %s25, 1
      %p179 = por %p177, %p178
      %p181 = scmp.ne.s32.totalorder %s166, %s180
      %p182 = scmp.eq.s32.totalorder %s25, 0
      %p183 = por %p181, %p182
      %s185 = sadd.s32 %s184, 1
      %p188 = scmp.eq.s32.totalorder %s19, 1
      %p189 = scmp.ne.s32.totalorder %s184, %s186
      %p190 = scmp.eq.s32.totalorder %s19, 0
      %p191 = por %p189, %p190
      %p192 = scmp.ne.s32.totalorder %s184, %s186
      %p193 = scmp.eq.s32.totalorder %s24, 1
      %p194 = por %p192, %p193
      %p195 = scmp.ne.s32.totalorder %s186, %s187
      %p196 = scmp.eq.s32.totalorder %s24, 0
      %p197 = por %p195, %p196
      %p198 = scmp.ne.s32.totalorder %s186, %s187
      %p199 = scmp.eq.s32.totalorder %s25, 1
      %p200 = por %p198, %p199
      %p202 = scmp.ne.s32.totalorder %s187, %s201
      %p203 = scmp.eq.s32.totalorder %s25, 0
      %p204 = por %p202, %p203
      %s206 = sadd.s32 %s205, 1
      %p209 = scmp.eq.s32.totalorder %s19, 1
      %p210 = scmp.ne.s32.totalorder %s205, %s207
      %p211 = scmp.eq.s32.totalorder %s19, 0
      %p212 = por %p210, %p211
      %p213 = scmp.ne.s32.totalorder %s205, %s207
      %p214 = scmp.eq.s32.totalorder %s24, 1
      %p215 = por %p213, %p214
      %p216 = scmp.ne.s32.totalorder %s207, %s208
      %p217 = scmp.eq.s32.totalorder %s24, 0
      %p218 = por %p216, %p217
      %p219 = scmp.ne.s32.totalorder %s207, %s208
      %p220 = scmp.eq.s32.totalorder %s25, 1
      %p221 = por %p219, %p220
      %p223 = scmp.ne.s32.totalorder %s208, %s222
      %p224 = scmp.eq.s32.totalorder %s25, 0
      %p225 = por %p223, %p224
      %s227 = sadd.s32 %s226, 1
      %p230 = scmp.eq.s32.totalorder %s19, 1
      %p231 = scmp.ne.s32.totalorder %s226, %s228
      %p232 = scmp.eq.s32.totalorder %s19, 0
      %p233 = por %p231, %p232
      %p234 = scmp.ne.s32.totalorder %s226, %s228
      %p235 = scmp.eq.s32.totalorder %s24, 1
      %p236 = por %p234, %p235
      %p237 = scmp.ne.s32.totalorder %s228, %s229
      %p238 = scmp.eq.s32.totalorder %s24, 0
      %p239 = por %p237, %p238
      %p240 = scmp.ne.s32.totalorder %s228, %s229
      %p241 = scmp.eq.s32.totalorder %s25, 1
      %p242 = por %p240, %p241
      %p244 = scmp.ne.s32.totalorder %s229, %s243
      %p245 = scmp.eq.s32.totalorder %s25, 0
      %p246 = por %p244, %p245
      %s247 = ssub.s32 %s19, %s26
      %p248 = scmp.eq.s32.totalorder %s247, 0
      %s250 = sadd.s32 %s249, 1
      %s251 = scalar_select %p248, %s249, %s250
      %p254 = pneg %p248
      %p255 = scmp.eq.s32.totalorder %s19, 1
      %p256 = por %p254, %p255
      %p257 = scmp.ne.s32.totalorder %s249, %s252
      %p258 = scmp.eq.s32.totalorder %s19, 0
      %p259 = por %p257, %p258
      %p260 = scmp.ne.s32.totalorder %s249, %s252
      %p261 = scmp.eq.s32.totalorder %s24, 1
      %p262 = por %p260, %p261
      %p263 = scmp.ne.s32.totalorder %s252, %s253
      %p264 = scmp.eq.s32.totalorder %s24, 0
      %p265 = por %p263, %p264
      %p266 = scmp.ne.s32.totalorder %s252, %s253
      %p267 = scmp.eq.s32.totalorder %s25, 1
      %p268 = por %p266, %p267
      %p270 = scmp.ne.s32.totalorder %s253, %s269
      %p271 = scmp.eq.s32.totalorder %s25, 0
      %p272 = por %p270, %p271
      %p273 = scmp.le.s32.totalorder 1, %s19
      %p274 = scmp.lt.s32.totalorder %s19, 3
      %p275 = pnand %p273, %p274
      %p276 = pneg %p275
      // Predicated region
      $region9: #{tpu_custom_call.1} parent=5 // pred_check
        _
      $region10: #{tpu_custom_call.1} parent=5 // pred_check_branch
        %278 = sbr.rel (%p275) target = $region12
      $region11: #{tpu_custom_call.1} parent=5 // pred_region
        %s279 = ssub.s32 %s19, 1
        // Predicated region
        $region13: #{tpu_custom_call.1} parent=11 // pred_check
          %p280 = pneg %p92
        $region14: #{tpu_custom_call.1} parent=11 // pred_check_branch
          %282 = sbr.rel (%p280) target = $region16
        $region15: #{tpu_custom_call.1} parent=11 // pred_region
          _
        $region16: #{tpu_custom_call.1} parent=11 // pred_fallthru
          _
        // Predicated region
        $region17: #{tpu_custom_call.1} parent=11 // pred_check
          %p283 = pneg %p113
        $region18: #{tpu_custom_call.1} parent=11 // pred_check_branch
          %285 = sbr.rel (%p283) target = $region20
        $region19: #{tpu_custom_call.1} parent=11 // pred_region
          _
        $region20: #{tpu_custom_call.1} parent=11 // pred_fallthru
          _
        // Predicated region
        $region21: #{tpu_custom_call.1} parent=11 // pred_check
          %p286 = pneg %p134
        $region22: #{tpu_custom_call.1} parent=11 // pred_check_branch
          %288 = sbr.rel (%p286) target = $region24
        $region23: #{tpu_custom_call.1} parent=11 // pred_region
          _
        $region24: #{tpu_custom_call.1} parent=11 // pred_fallthru
          _
        // Predicated region
        $region25: #{tpu_custom_call.1} parent=11 // pred_check
          %p289 = pneg %p155
        $region26: #{tpu_custom_call.1} parent=11 // pred_check_branch
          %291 = sbr.rel (%p289) target = $region28
        $region27: #{tpu_custom_call.1} parent=11 // pred_region
          _
        $region28: #{tpu_custom_call.1} parent=11 // pred_fallthru
          _
        // Predicated region
        $region29: #{tpu_custom_call.1} parent=11 // pred_check
          %p292 = pneg %p176
        $region30: #{tpu_custom_call.1} parent=11 // pred_check_branch
          %294 = sbr.rel (%p292) target = $region32
        $region31: #{tpu_custom_call.1} parent=11 // pred_region
          _
        $region32: #{tpu_custom_call.1} parent=11 // pred_fallthru
          _
        // Predicated region
        $region33: #{tpu_custom_call.1} parent=11 // pred_check
          %p295 = pneg %p197
        $region34: #{tpu_custom_call.1} parent=11 // pred_check_branch
          %297 = sbr.rel (%p295) target = $region36
        $region35: #{tpu_custom_call.1} parent=11 // pred_region
          _
        $region36: #{tpu_custom_call.1} parent=11 // pred_fallthru
          _
        // Predicated region
        $region37: #{tpu_custom_call.1} parent=11 // pred_check
          %p298 = pneg %p218
        $region38: #{tpu_custom_call.1} parent=11 // pred_check_branch
          %300 = sbr.rel (%p298) target = $region40
        $region39: #{tpu_custom_call.1} parent=11 // pred_region
          _
        $region40: #{tpu_custom_call.1} parent=11 // pred_fallthru
          _
        // Predicated region
        $region41: #{tpu_custom_call.1} parent=11 // pred_check
          %p301 = pneg %p239
        $region42: #{tpu_custom_call.1} parent=11 // pred_check_branch
          %303 = sbr.rel (%p301) target = $region44
        $region43: #{tpu_custom_call.1} parent=11 // pred_region
          _
        $region44: #{tpu_custom_call.1} parent=11 // pred_fallthru
          _
      $region12: #{tpu_custom_call.1} parent=5 // pred_fallthru
        _
      %p304 = scmp.lt.s32.totalorder %s19, 2
      // Predicated region
      $region45: #{tpu_custom_call.1} parent=5 // pred_check
        %p305 = pneg %p304
      $region46: #{tpu_custom_call.1} parent=5 // pred_check_branch
        %307 = sbr.rel (%p305) target = $region48
      $region47: #{tpu_custom_call.1} parent=5 // pred_region
        // Predicated region
        $region49: #{tpu_custom_call.1} parent=47 // pred_check
          %p308 = pneg %p39
        $region50: #{tpu_custom_call.1} parent=47 // pred_check_branch
          %310 = sbr.rel (%p308) target = $region52
        $region51: #{tpu_custom_call.1} parent=47 // pred_region
          %s311 = smul.u32 16, %s19
          %p312 = scmp.lt.s32.totalorder %s311, 31
          %s313 = scalar_select %p312, %s311, 31
          %s314 = smul.addr %s313, 8
          %s315 = scalar_lea.vmem %s0, %s314
          %s316 = smul.u32 16, %s19
        $region52: #{tpu_custom_call.1} parent=47 // pred_fallthru
          _
        // Predicated region
        $region53: #{tpu_custom_call.1} parent=47 // pred_check
          %p317 = pneg %p65
        $region54: #{tpu_custom_call.1} parent=47 // pred_check_branch
          %319 = sbr.rel (%p317) target = $region56
        $region55: #{tpu_custom_call.1} parent=47 // pred_region
          %s320 = smul.u32 16, %s19
          %p321 = scmp.lt.s32.totalorder %s320, 31
          %s322 = scalar_select %p321, %s320, 31
          %s323 = smul.addr %s322, 4
          %s324 = scalar_lea.vmem %s1, %s323
          %s325 = smul.u32 16, %s19
        $region56: #{tpu_custom_call.1} parent=47 // pred_fallthru
          _
      $region48: #{tpu_custom_call.1} parent=5 // pred_fallthru
        _
      %p326 = scmp.le.s32.totalorder 1, %s19
      %p327 = scmp.lt.s32.totalorder %s19, 3
      %p328 = pnand %p326, %p327
      %p329 = pneg %p328
      // Predicated region
      $region57: #{tpu_custom_call.1} parent=5 // pred_check
        _
      $region58: #{tpu_custom_call.1} parent=5 // pred_check_branch
        %331 = sbr.rel (%p328) target = $region60
      $region59: #{tpu_custom_call.1} parent=5 // pred_region
        %s332 = ssub.s32 %s19, 1
        %s333 = smul.u32 16, %s24
        %p334 = scmp.lt.s32.totalorder %s333, 31
        %s335 = scalar_select %p334, %s333, 31
        %s336 = smul.addr %s335, 8
        %s337 = scalar_lea.vmem %s0, %s336
        %p338 = pneg %p45
        %p339 = pneg %p42
        %s340 = smul.u32 16, %s24
        %p341 = scmp.lt.s32.totalorder %s340, 31
        %s342 = scalar_select %p341, %s340, 31
        %s343 = smul.addr %s342, 4
        %s344 = scalar_lea.vmem %s1, %s343
        %p345 = pneg %p71
        %p346 = pneg %p68
        %p347 = pneg %p92
        %p348 = pneg %p89
        %p349 = pneg %p113
        %p350 = pneg %p110
        %p351 = pneg %p134
        %p352 = pneg %p131
        %p353 = pneg %p155
        %p354 = pneg %p152
        %p355 = pneg %p176
        %p356 = pneg %p173
        %p357 = pneg %p197
        %p358 = pneg %p194
        %p359 = pneg %p218
        %p360 = pneg %p215
        %p361 = pneg %p239
        %p362 = pneg %p236
        %p363 = pneg %p265
        %p364 = pneg %p262
        %s365 = sand.u32 %s252, 1
        %s366 = scalar_lea.sflag [#allocation3], %s365
        %s367 = sand.u32 %s252, 1
        %s368 = smul.addr %s367, 192
        %s369 = scalar_lea.vmem [#allocation2], %s368
        %s370 = smul.u32 16, %s24
        %p371 = scmp.lt.s32.totalorder %s370, 31
        %s372 = scalar_select %p371, %s370, 31
        %s373 = smul.addr %s372, 8
        %s374 = scalar_lea.vmem %s0, %s373
        %s375 = smul.u32 16, %s24
        %s376 = smul.u32 16, %s24
        %p377 = scmp.lt.s32.totalorder %s376, 31
        %s378 = scalar_select %p377, %s376, 31
        %s379 = smul.addr %s378, 4
        %s380 = scalar_lea.vmem %s1, %s379
        %s381 = smul.u32 16, %s24
        %s382 = smul.u32 16, %s24
        %v384 = vld [vmem:[%s374] sm:$0xff]
        %v385 = vld [vmem:[%s374 + $0x8] sm:$0xff]
        %v386 = vld [vmem:[%s374 + $0x10] sm:$0xff]
        %v387 = vld [vmem:[%s374 + $0x18] sm:$0xff]
        %v388 = vld [vmem:[%s374 + $0x20] sm:$0xff]
        %v389 = vld [vmem:[%s374 + $0x28] sm:$0xff]
        %v390 = vld [vmem:[%s374 + $0x30] sm:$0xff]
        %v391 = vld [vmem:[%s374 + $0x38] sm:$0xff]
        %v392 = vld [vmem:[%s374 + $0x40] sm:$0xff]
        %v393 = vld [vmem:[%s374 + $0x48] sm:$0xff]
        %v394 = vld [vmem:[%s374 + $0x50] sm:$0xff]
        %v395 = vld [vmem:[%s374 + $0x58] sm:$0xff]
        %v396 = vld [vmem:[%s374 + $0x60] sm:$0xff]
        %v397 = vld [vmem:[%s374 + $0x68] sm:$0xff]
        %v398 = vld [vmem:[%s374 + $0x70] sm:$0xff]
        %v399 = vld [vmem:[%s374 + $0x78] sm:$0xff]
        %v400 = vpack.c.bf16 %v385, %v384
        %v401 = vpack.c.bf16 %v387, %v386
        %v402 = vpack.c.bf16 %v389, %v388
        %v403 = vpack.c.bf16 %v391, %v390
        %v404 = vpack.c.bf16 %v393, %v392
        %v405 = vpack.c.bf16 %v395, %v394
        %v406 = vpack.c.bf16 %v397, %v396
        %v407 = vpack.c.bf16 %v399, %v398
        %v408 = vld [vmem:[%s2] sm:$0xf]
        %v409 = vld [vmem:[%s2 + $0x4] sm:$0xf]
        %v410 = vld [vmem:[%s2 + $0x8] sm:$0xf]
        %v411 = vld [vmem:[%s2 + $0xc] sm:$0xf]
        %v412 = vld [vmem:[%s2 + $0x10] sm:$0xf]
        %v413 = vld [vmem:[%s2 + $0x14] sm:$0xf]
        %v414 = vld [vmem:[%s2 + $0x18] sm:$0xf]
        %v415 = vld [vmem:[%s2 + $0x1c] sm:$0xf]
        %v416 = vld [vmem:[%s3] sm:$0x1]
        %v418 = vlaneseq
        %v419 = vshrl.u32 %v418, 7
        %v420 = vsub.s32 0, %v419
        %v421 = vrot.slane %v416, %v420
        %v431 = vunpack.c.l.b16 %v408
        %v432 = vunpack.c.l.b16 %v409
        %v433 = vunpack.c.l.b16 %v410
        %v434 = vunpack.c.l.b16 %v411
        %v435 = vunpack.c.l.b16 %v412
        %v436 = vunpack.c.l.b16 %v413
        %v437 = vunpack.c.l.b16 %v414
        %v438 = vunpack.c.l.b16 %v415
        %v439 = vpack.c.b16 %v432, %v431
        %v440 = vpack.c.b16 %v434, %v433
        %v441 = vpack.c.b16 %v436, %v435
        %v442 = vpack.c.b16 %v438, %v437
        %vm447 = vcmask 523264
        %v449 = vsel %vm447, %v400, 0
        %v452 = vsel %vm447, %v401, 0
        %v455 = vsel %vm447, %v402, 0
        %v458 = vsel %vm447, %v403, 0
        %v461 = vsel %vm447, %v404, 0
        %v464 = vsel %vm447, %v405, 0
        %v467 = vsel %vm447, %v406, 0
        %v470 = vsel %vm447, %v407, 0
        %472 = vmatprep.subr.bf16.mxu0 0
        %473 = vmatpush1.bf16.msra.mxu0 0
        %474 = vmatprep.subr.bf16.mxu0 0
        %475 = vmatpush1.bf16.msra.mxu0 0
        %476 = vmatprep.subr.bf16.mxu0 0
        %477 = vmatpush1.bf16.msra.mxu0 0
        %478 = vmatprep.subr.bf16.mxu0 0
        %479 = vmatpush1.bf16.msra.mxu0 0
        %480 = vmatprep.subr.bf16.mxu0 0
        %481 = vmatpush1.bf16.msra.mxu0 %v442
        %482 = vmatprep.subr.bf16.mxu0 0
        %483 = vmatpush1.bf16.msra.mxu0 %v441
        %484 = vmatprep.subr.bf16.mxu0 0
        %485 = vmatpush1.bf16.msra.mxu0 %v440
        %486 = vmatprep.subr.bf16.mxu0 0
        %487 = vmatpush1.bf16.msra.mxu0 %v439
        %488 = vmatprep.subr.bf16.mxu0 0
        %489 = vmatpush2.bf16.msra.mxu0 0
        %490 = vmatprep.subr.bf16.mxu0 0
        %491 = vmatpush2.bf16.msra.mxu0 0
        %492 = vmatprep.subr.bf16.mxu0 0
        %493 = vmatpush2.bf16.msra.mxu0 0
        %494 = vmatprep.subr.bf16.mxu0 0
        %495 = vmatpush2.bf16.msra.mxu0 0
        %496 = vmatprep.subr.bf16.mxu0 0
        %497 = vmatpush2.bf16.msra.mxu0 0
        %498 = vmatprep.subr.bf16.mxu0 0
        %499 = vmatpush2.bf16.msra.mxu0 0
        %500 = vmatprep.subr.bf16.mxu0 0
        %501 = vmatpush2.bf16.msra.mxu0 0
        %502 = vmatprep.subr.bf16.mxu0 0
        %503 = vmatpush2.bf16.msra.mxu0 0
        %504 = vmatprep.mubr.bf16.mxu0 0
        %505 = vmatmul.mubr.bf16.gmra.mxu0 %v449
        %v506 = vpop.f32.mrf.mxu0
        %v507 = vadd.f32 %v421, %v506
        %v508 = vpop.f32.mrf.mxu0
        %v509 = vpop.f32.mrf.mxu0
        %v510 = vadd.f32 %v421, %v509
        %v511 = vpop.f32.mrf.mxu0
        %512 = vmatprep.mubr.bf16.mxu0 0
        %513 = vmatmul.mubr.bf16.gmra.mxu0 %v452
        %v514 = vpop.f32.mrf.mxu0
        %v515 = vadd.f32 %v421, %v514
        %v516 = vpop.f32.mrf.mxu0
        %v517 = vpop.f32.mrf.mxu0
        %v518 = vadd.f32 %v421, %v517
        %v519 = vpop.f32.mrf.mxu0
        %520 = vmatprep.mubr.bf16.mxu0 0
        %521 = vmatmul.mubr.bf16.gmra.mxu0 %v455
        %v522 = vpop.f32.mrf.mxu0
        %v523 = vadd.f32 %v421, %v522
        %v524 = vpop.f32.mrf.mxu0
        %v525 = vpop.f32.mrf.mxu0
        %v526 = vadd.f32 %v421, %v525
        %v527 = vpop.f32.mrf.mxu0
        %528 = vmatprep.mubr.bf16.mxu0 0
        %529 = vmatmul.mubr.bf16.gmra.mxu0 %v458
        %v530 = vpop.f32.mrf.mxu0
        %v531 = vadd.f32 %v421, %v530
        %v532 = vpop.f32.mrf.mxu0
        %v533 = vpop.f32.mrf.mxu0
        %v534 = vadd.f32 %v421, %v533
        %v535 = vpop.f32.mrf.mxu0
        %536 = vmatprep.mubr.bf16.mxu0 0
        %537 = vmatmul.mubr.bf16.gmra.mxu0 %v461
        %v538 = vpop.f32.mrf.mxu0
        %v539 = vadd.f32 %v421, %v538
        %v540 = vpop.f32.mrf.mxu0
        %v541 = vpop.f32.mrf.mxu0
        %v542 = vadd.f32 %v421, %v541
        %v543 = vpop.f32.mrf.mxu0
        %544 = vmatprep.mubr.bf16.mxu0 0
        %545 = vmatmul.mubr.bf16.gmra.mxu0 %v464
        %v546 = vpop.f32.mrf.mxu0
        %v547 = vadd.f32 %v421, %v546
        %v548 = vpop.f32.mrf.mxu0
        %v549 = vpop.f32.mrf.mxu0
        %v550 = vadd.f32 %v421, %v549
        %v551 = vpop.f32.mrf.mxu0
        %552 = vmatprep.mubr.bf16.mxu0 0
        %553 = vmatmul.mubr.bf16.gmra.mxu0 %v467
        %v554 = vpop.f32.mrf.mxu0
        %v555 = vadd.f32 %v421, %v554
        %v556 = vpop.f32.mrf.mxu0
        %v557 = vpop.f32.mrf.mxu0
        %v558 = vadd.f32 %v421, %v557
        %v559 = vpop.f32.mrf.mxu0
        %560 = vmatprep.mubr.bf16.mxu0 0
        %561 = vmatmul.mubr.bf16.gmra.mxu0 %v470
        %v562 = vpop.f32.mrf.mxu0
        %v563 = vadd.f32 %v421, %v562
        %v564 = vpop.f32.mrf.mxu0
        %v565 = vpop.f32.mrf.mxu0
        %v566 = vadd.f32 %v421, %v565
        %v567 = vpop.f32.mrf.mxu0
        %568 = vdwg.mxu0
        %v569 = vmax.f32 %v507, 0.0
        %v570 = vmax.f32 %v510, 0.0
        %v571 = vmax.f32 %v515, 0.0
        %v572 = vmax.f32 %v518, 0.0
        %v573 = vmax.f32 %v523, 0.0
        %v574 = vmax.f32 %v526, 0.0
        %v575 = vmax.f32 %v531, 0.0
        %v576 = vmax.f32 %v534, 0.0
        %v577 = vmax.f32 %v539, 0.0
        %v578 = vmax.f32 %v542, 0.0
        %v579 = vmax.f32 %v547, 0.0
        %v580 = vmax.f32 %v550, 0.0
        %v581 = vmax.f32 %v555, 0.0
        %v582 = vmax.f32 %v558, 0.0
        %v583 = vmax.f32 %v563, 0.0
        %v584 = vmax.f32 %v566, 0.0
        %v585 = vpack.c.bf16 %v570, %v569
        %v586 = vpack.c.bf16 %v572, %v571
        %v587 = vpack.c.bf16 %v574, %v573
        %v588 = vpack.c.bf16 %v576, %v575
        %v589 = vpack.c.bf16 %v578, %v577
        %v590 = vpack.c.bf16 %v580, %v579
        %v591 = vpack.c.bf16 %v582, %v581
        %v592 = vpack.c.bf16 %v584, %v583
        %v593 = vld [vmem:[%s4] sm:$0xff]
        %v594 = vld [vmem:[%s4 + $0x8] sm:$0xff]
        %v595 = vld [vmem:[%s4 + $0x10] sm:$0xff]
        %v596 = vld [vmem:[%s4 + $0x18] sm:$0xff]
        %v597 = vld [vmem:[%s4 + $0x20] sm:$0xff]
        %v598 = vld [vmem:[%s4 + $0x28] sm:$0xff]
        %v599 = vld [vmem:[%s4 + $0x30] sm:$0xff]
        %v600 = vld [vmem:[%s4 + $0x38] sm:$0xff]
        %v601 = vld [vmem:[%s4 + $0x40] sm:$0xff]
        %v602 = vld [vmem:[%s4 + $0x48] sm:$0xff]
        %v603 = vld [vmem:[%s4 + $0x50] sm:$0xff]
        %v604 = vld [vmem:[%s4 + $0x58] sm:$0xff]
        %v605 = vld [vmem:[%s4 + $0x60] sm:$0xff]
        %v606 = vld [vmem:[%s4 + $0x68] sm:$0xff]
        %v607 = vld [vmem:[%s4 + $0x70] sm:$0xff]
        %v608 = vld [vmem:[%s4 + $0x78] sm:$0xff]
        %v609 = vld [vmem:[%s5] sm:$0x3]
        %v611 = vlaneseq
        %v612 = vshrl.u32 %v611, 7
        %v613 = vsub.s32 0, %v612
        %v614 = vrot.slane %v609, %v613
        %v615 = vlaneseq
        %v616 = vshrl.u32 %v615, 7
        %v617 = vsub.s32 1, %v616
        %v618 = vrot.slane %v609, %v617
        %v637 = vunpack.c.l.b16 %v593
        %v638 = vunpack.c.h.b16 %v593
        %v639 = vunpack.c.l.b16 %v594
        %v640 = vunpack.c.h.b16 %v594
        %v641 = vunpack.c.l.b16 %v595
        %v642 = vunpack.c.h.b16 %v595
        %v643 = vunpack.c.l.b16 %v596
        %v644 = vunpack.c.h.b16 %v596
        %v645 = vunpack.c.l.b16 %v597
        %v646 = vunpack.c.h.b16 %v597
        %v647 = vunpack.c.l.b16 %v598
        %v648 = vunpack.c.h.b16 %v598
        %v649 = vunpack.c.l.b16 %v599
        %v650 = vunpack.c.h.b16 %v599
        %v651 = vunpack.c.l.b16 %v600
        %v652 = vunpack.c.h.b16 %v600
        %v653 = vunpack.c.l.b16 %v601
        %v654 = vunpack.c.h.b16 %v601
        %v655 = vunpack.c.l.b16 %v602
        %v656 = vunpack.c.h.b16 %v602
        %v657 = vunpack.c.l.b16 %v603
        %v658 = vunpack.c.h.b16 %v603
        %v659 = vunpack.c.l.b16 %v604
        %v660 = vunpack.c.h.b16 %v604
        %v661 = vunpack.c.l.b16 %v605
        %v662 = vunpack.c.h.b16 %v605
        %v663 = vunpack.c.l.b16 %v606
        %v664 = vunpack.c.h.b16 %v606
        %v665 = vunpack.c.l.b16 %v607
        %v666 = vunpack.c.h.b16 %v607
        %v667 = vunpack.c.l.b16 %v608
        %v668 = vunpack.c.h.b16 %v608
        %v669 = vpack.c.b16 %v639, %v637
        %v670 = vpack.c.b16 %v640, %v638
        %v671 = vpack.c.b16 %v643, %v641
        %v672 = vpack.c.b16 %v644, %v642
        %v673 = vpack.c.b16 %v647, %v645
        %v674 = vpack.c.b16 %v648, %v646
        %v675 = vpack.c.b16 %v651, %v649
        %v676 = vpack.c.b16 %v652, %v650
        %v677 = vpack.c.b16 %v655, %v653
        %v678 = vpack.c.b16 %v656, %v654
        %v679 = vpack.c.b16 %v659, %v657
        %v680 = vpack.c.b16 %v660, %v658
        %v681 = vpack.c.b16 %v663, %v661
        %v682 = vpack.c.b16 %v664, %v662
        %v683 = vpack.c.b16 %v667, %v665
        %v684 = vpack.c.b16 %v668, %v666
        %701 = vmatprep.subr.bf16.mxu0 %v684
        %702 = vmatpush1.bf16.msra.mxu0 %v683
        %703 = vmatprep.subr.bf16.mxu0 %v682
        %704 = vmatpush1.bf16.msra.mxu0 %v681
        %705 = vmatprep.subr.bf16.mxu0 %v680
        %706 = vmatpush1.bf16.msra.mxu0 %v679
        %707 = vmatprep.subr.bf16.mxu0 %v678
        %708 = vmatpush1.bf16.msra.mxu0 %v677
        %709 = vmatprep.subr.bf16.mxu0 %v676
        %710 = vmatpush1.bf16.msra.mxu0 %v675
        %711 = vmatprep.subr.bf16.mxu0 %v674
        %712 = vmatpush1.bf16.msra.mxu0 %v673
        %713 = vmatprep.subr.bf16.mxu0 %v672
        %714 = vmatpush1.bf16.msra.mxu0 %v671
        %715 = vmatprep.subr.bf16.mxu0 %v670
        %716 = vmatpush1.bf16.msra.mxu0 %v669
        %717 = vmatprep.subr.bf16.mxu0 0
        %718 = vmatpush2.bf16.msra.mxu0 0
        %719 = vmatprep.subr.bf16.mxu0 0
        %720 = vmatpush2.bf16.msra.mxu0 0
        %721 = vmatprep.subr.bf16.mxu0 0
        %722 = vmatpush2.bf16.msra.mxu0 0
        %723 = vmatprep.subr.bf16.mxu0 0
        %724 = vmatpush2.bf16.msra.mxu0 0
        %725 = vmatprep.subr.bf16.mxu0 0
        %726 = vmatpush2.bf16.msra.mxu0 0
        %727 = vmatprep.subr.bf16.mxu0 0
        %728 = vmatpush2.bf16.msra.mxu0 0
        %729 = vmatprep.subr.bf16.mxu0 0
        %730 = vmatpush2.bf16.msra.mxu0 0
        %731 = vmatprep.subr.bf16.mxu0 0
        %732 = vmatpush2.bf16.msra.mxu0 0
        %733 = vmatprep.mubr.bf16.mxu0 0
        %734 = vmatmul.mubr.bf16.gmra.mxu0 %v585
        %v735 = vpop.f32.mrf.mxu0
        %v736 = vadd.f32 %v614, %v735
        %v737 = vpop.f32.mrf.mxu0
        %v738 = vadd.f32 %v618, %v737
        %v739 = vpop.f32.mrf.mxu0
        %v740 = vadd.f32 %v614, %v739
        %v741 = vpop.f32.mrf.mxu0
        %v742 = vadd.f32 %v618, %v741
        %743 = vmatprep.mubr.bf16.mxu0 0
        %744 = vmatmul.mubr.bf16.gmra.mxu0 %v586
        %v745 = vpop.f32.mrf.mxu0
        %v746 = vadd.f32 %v614, %v745
        %v747 = vpop.f32.mrf.mxu0
        %v748 = vadd.f32 %v618, %v747
        %v749 = vpop.f32.mrf.mxu0
        %v750 = vadd.f32 %v614, %v749
        %v751 = vpop.f32.mrf.mxu0
        %v752 = vadd.f32 %v618, %v751
        %753 = vmatprep.mubr.bf16.mxu0 0
        %754 = vmatmul.mubr.bf16.gmra.mxu0 %v587
        %v755 = vpop.f32.mrf.mxu0
        %v756 = vadd.f32 %v614, %v755
        %v757 = vpop.f32.mrf.mxu0
        %v758 = vadd.f32 %v618, %v757
        %v759 = vpop.f32.mrf.mxu0
        %v760 = vadd.f32 %v614, %v759
        %v761 = vpop.f32.mrf.mxu0
        %v762 = vadd.f32 %v618, %v761
        %763 = vmatprep.mubr.bf16.mxu0 0
        %764 = vmatmul.mubr.bf16.gmra.mxu0 %v588
        %v765 = vpop.f32.mrf.mxu0
        %v766 = vadd.f32 %v614, %v765
        %v767 = vpop.f32.mrf.mxu0
        %v768 = vadd.f32 %v618, %v767
        %v769 = vpop.f32.mrf.mxu0
        %v770 = vadd.f32 %v614, %v769
        %v771 = vpop.f32.mrf.mxu0
        %v772 = vadd.f32 %v618, %v771
        %773 = vmatprep.mubr.bf16.mxu0 0
        %774 = vmatmul.mubr.bf16.gmra.mxu0 %v589
        %v775 = vpop.f32.mrf.mxu0
        %v776 = vadd.f32 %v614, %v775
        %v777 = vpop.f32.mrf.mxu0
        %v778 = vadd.f32 %v618, %v777
        %v779 = vpop.f32.mrf.mxu0
        %v780 = vadd.f32 %v614, %v779
        %v781 = vpop.f32.mrf.mxu0
        %v782 = vadd.f32 %v618, %v781
        %783 = vmatprep.mubr.bf16.mxu0 0
        %784 = vmatmul.mubr.bf16.gmra.mxu0 %v590
        %v785 = vpop.f32.mrf.mxu0
        %v786 = vadd.f32 %v614, %v785
        %v787 = vpop.f32.mrf.mxu0
        %v788 = vadd.f32 %v618, %v787
        %v789 = vpop.f32.mrf.mxu0
        %v790 = vadd.f32 %v614, %v789
        %v791 = vpop.f32.mrf.mxu0
        %v792 = vadd.f32 %v618, %v791
        %793 = vmatprep.mubr.bf16.mxu0 0
        %794 = vmatmul.mubr.bf16.gmra.mxu0 %v591
        %v795 = vpop.f32.mrf.mxu0
        %v796 = vadd.f32 %v614, %v795
        %v797 = vpop.f32.mrf.mxu0
        %v798 = vadd.f32 %v618, %v797
        %v799 = vpop.f32.mrf.mxu0
        %v800 = vadd.f32 %v614, %v799
        %v801 = vpop.f32.mrf.mxu0
        %v802 = vadd.f32 %v618, %v801
        %803 = vmatprep.mubr.bf16.mxu0 0
        %804 = vmatmul.mubr.bf16.gmra.mxu0 %v592
        %v805 = vpop.f32.mrf.mxu0
        %v806 = vadd.f32 %v614, %v805
        %v807 = vpop.f32.mrf.mxu0
        %v808 = vadd.f32 %v618, %v807
        %v809 = vpop.f32.mrf.mxu0
        %v810 = vadd.f32 %v614, %v809
        %v811 = vpop.f32.mrf.mxu0
        %v812 = vadd.f32 %v618, %v811
        %813 = vdwg.mxu0
        %v814 = vpack.c.bf16 %v740, %v736
        %v815 = vpack.c.bf16 %v742, %v738
        %v816 = vpack.c.bf16 %v750, %v746
        %v817 = vpack.c.bf16 %v752, %v748
        %v818 = vpack.c.bf16 %v760, %v756
        %v819 = vpack.c.bf16 %v762, %v758
        %v820 = vpack.c.bf16 %v770, %v766
        %v821 = vpack.c.bf16 %v772, %v768
        %v822 = vpack.c.bf16 %v780, %v776
        %v823 = vpack.c.bf16 %v782, %v778
        %v824 = vpack.c.bf16 %v790, %v786
        %v825 = vpack.c.bf16 %v792, %v788
        %v826 = vpack.c.bf16 %v800, %v796
        %v827 = vpack.c.bf16 %v802, %v798
        %v828 = vpack.c.bf16 %v810, %v806
        %v829 = vpack.c.bf16 %v812, %v808
        %v846 = vunpack.c.l.b16 %v814
        %v847 = vunpack.c.l.b16 %v815
        %v848 = vunpack.c.h.b16 %v814
        %v849 = vunpack.c.h.b16 %v815
        %v850 = vunpack.c.l.b16 %v816
        %v851 = vunpack.c.l.b16 %v817
        %v852 = vunpack.c.h.b16 %v816
        %v853 = vunpack.c.h.b16 %v817
        %v854 = vunpack.c.l.b16 %v818
        %v855 = vunpack.c.l.b16 %v819
        %v856 = vunpack.c.h.b16 %v818
        %v857 = vunpack.c.h.b16 %v819
        %v858 = vunpack.c.l.b16 %v820
        %v859 = vunpack.c.l.b16 %v821
        %v860 = vunpack.c.h.b16 %v820
        %v861 = vunpack.c.h.b16 %v821
        %v862 = vunpack.c.l.b16 %v822
        %v863 = vunpack.c.l.b16 %v823
        %v864 = vunpack.c.h.b16 %v822
        %v865 = vunpack.c.h.b16 %v823
        %v866 = vunpack.c.l.b16 %v824
        %v867 = vunpack.c.l.b16 %v825
        %v868 = vunpack.c.h.b16 %v824
        %v869 = vunpack.c.h.b16 %v825
        %v870 = vunpack.c.l.b16 %v826
        %v871 = vunpack.c.l.b16 %v827
        %v872 = vunpack.c.h.b16 %v826
        %v873 = vunpack.c.h.b16 %v827
        %v874 = vunpack.c.l.b16 %v828
        %v875 = vunpack.c.l.b16 %v829
        %v876 = vunpack.c.h.b16 %v828
        %v877 = vunpack.c.h.b16 %v829
        %v878 = vpack.c.b16 %v847, %v846
        %v879 = vpack.c.b16 %v849, %v848
        %v880 = vpack.c.b16 %v851, %v850
        %v881 = vpack.c.b16 %v853, %v852
        %v882 = vpack.c.b16 %v855, %v854
        %v883 = vpack.c.b16 %v857, %v856
        %v884 = vpack.c.b16 %v859, %v858
        %v885 = vpack.c.b16 %v861, %v860
        %v886 = vpack.c.b16 %v863, %v862
        %v887 = vpack.c.b16 %v865, %v864
        %v888 = vpack.c.b16 %v867, %v866
        %v889 = vpack.c.b16 %v869, %v868
        %v890 = vpack.c.b16 %v871, %v870
        %v891 = vpack.c.b16 %v873, %v872
        %v892 = vpack.c.b16 %v875, %v874
        %v893 = vpack.c.b16 %v877, %v876
        %910 = vst [vmem:[%s369 + $0x4] sm:$0xff] %v878
        %911 = vst [vmem:[%s369 + $0x10] sm:$0xff] %v879
        %912 = vst [vmem:[%s369 + $0x1c] sm:$0xff] %v880
        %913 = vst [vmem:[%s369 + $0x28] sm:$0xff] %v881
        %914 = vst [vmem:[%s369 + $0x34] sm:$0xff] %v882
        %915 = vst [vmem:[%s369 + $0x40] sm:$0xff] %v883
        %916 = vst [vmem:[%s369 + $0x4c] sm:$0xff] %v884
        %917 = vst [vmem:[%s369 + $0x58] sm:$0xff] %v885
        %918 = vst [vmem:[%s369 + $0x64] sm:$0xff] %v886
        %919 = vst [vmem:[%s369 + $0x70] sm:$0xff] %v887
        %920 = vst [vmem:[%s369 + $0x7c] sm:$0xff] %v888
        %921 = vst [vmem:[%s369 + $0x88] sm:$0xff] %v889
        %922 = vst [vmem:[%s369 + $0x94] sm:$0xff] %v890
        %923 = vst [vmem:[%s369 + $0xa0] sm:$0xff] %v891
        %924 = vst [vmem:[%s369 + $0xac] sm:$0xff] %v892
        %925 = vst [vmem:[%s369 + $0xb8] sm:$0xff] %v893
        %v926 = vld [vmem:[%s380] sm:$0xf]
        %v927 = vld [vmem:[%s380 + $0x4] sm:$0xf]
        %v928 = vld [vmem:[%s380 + $0x8] sm:$0xf]
        %v929 = vld [vmem:[%s380 + $0xc] sm:$0xf]
        %v930 = vld [vmem:[%s380 + $0x10] sm:$0xf]
        %v931 = vld [vmem:[%s380 + $0x14] sm:$0xf]
        %v932 = vld [vmem:[%s380 + $0x18] sm:$0xf]
        %v933 = vld [vmem:[%s380 + $0x1c] sm:$0xf]
        %v934 = vld [vmem:[%s380 + $0x20] sm:$0xf]
        %v935 = vld [vmem:[%s380 + $0x24] sm:$0xf]
        %v936 = vld [vmem:[%s380 + $0x28] sm:$0xf]
        %v937 = vld [vmem:[%s380 + $0x2c] sm:$0xf]
        %v938 = vld [vmem:[%s380 + $0x30] sm:$0xf]
        %v939 = vld [vmem:[%s380 + $0x34] sm:$0xf]
        %v940 = vld [vmem:[%s380 + $0x38] sm:$0xf]
        %v941 = vld [vmem:[%s380 + $0x3c] sm:$0xf]
        %v942 = vunpack.c.l.bf16 %v926
        %v943 = vunpack.c.l.bf16 %v927
        %v944 = vunpack.c.l.bf16 %v928
        %v945 = vunpack.c.l.bf16 %v929
        %v946 = vunpack.c.l.bf16 %v930
        %v947 = vunpack.c.l.bf16 %v931
        %v948 = vunpack.c.l.bf16 %v932
        %v949 = vunpack.c.l.bf16 %v933
        %v950 = vunpack.c.l.bf16 %v934
        %v951 = vunpack.c.l.bf16 %v935
        %v952 = vunpack.c.l.bf16 %v936
        %v953 = vunpack.c.l.bf16 %v937
        %v954 = vunpack.c.l.bf16 %v938
        %v955 = vunpack.c.l.bf16 %v939
        %v956 = vunpack.c.l.bf16 %v940
        %v957 = vunpack.c.l.bf16 %v941
        %v958 = vmul.f32 %v738, 0.5
        %v959 = vmul.f32 %v742, 0.5
        %v960 = vmul.f32 %v748, 0.5
        %v961 = vmul.f32 %v752, 0.5
        %v962 = vmul.f32 %v758, 0.5
        %v963 = vmul.f32 %v762, 0.5
        %v964 = vmul.f32 %v768, 0.5
        %v965 = vmul.f32 %v772, 0.5
        %v966 = vmul.f32 %v778, 0.5
        %v967 = vmul.f32 %v782, 0.5
        %v968 = vmul.f32 %v788, 0.5
        %v969 = vmul.f32 %v792, 0.5
        %v970 = vmul.f32 %v798, 0.5
        %v971 = vmul.f32 %v802, 0.5
        %v972 = vmul.f32 %v808, 0.5
        %v973 = vmul.f32 %v812, 0.5
        %v974 = vmul.f32 %v958, 1.442695
        %v975 = vpow.pop %v974
        %v976 = vmul.f32 %v959, 1.442695
        %v977 = vpow.pop %v976
        %v978 = vmul.f32 %v960, 1.442695
        %v979 = vpow.pop %v978
        %v980 = vmul.f32 %v961, 1.442695
        %v981 = vpow.pop %v980
        %v982 = vmul.f32 %v962, 1.442695
        %v983 = vpow.pop %v982
        %v984 = vmul.f32 %v963, 1.442695
        %v985 = vpow.pop %v984
        %v986 = vmul.f32 %v964, 1.442695
        %v987 = vpow.pop %v986
        %v988 = vmul.f32 %v965, 1.442695
        %v989 = vpow.pop %v988
        %v990 = vmul.f32 %v966, 1.442695
        %v991 = vpow.pop %v990
        %v992 = vmul.f32 %v967, 1.442695
        %v993 = vpow.pop %v992
        %v994 = vmul.f32 %v968, 1.442695
        %v995 = vpow.pop %v994
        %v996 = vmul.f32 %v969, 1.442695
        %v997 = vpow.pop %v996
        %v998 = vmul.f32 %v970, 1.442695
        %v999 = vpow.pop %v998
        %v1000 = vmul.f32 %v971, 1.442695
        %v1001 = vpow.pop %v1000
        %v1002 = vmul.f32 %v972, 1.442695
        %v1003 = vpow.pop %v1002
        %v1004 = vmul.f32 %v973, 1.442695
        %v1005 = vpow.pop %v1004
        %v1006 = vmul.f32 %v942, %v975
        %v1007 = vmul.f32 %v943, %v977
        %v1008 = vmul.f32 %v944, %v979
        %v1009 = vmul.f32 %v945, %v981
        %v1010 = vmul.f32 %v946, %v983
        %v1011 = vmul.f32 %v947, %v985
        %v1012 = vmul.f32 %v948, %v987
        %v1013 = vmul.f32 %v949, %v989
        %v1014 = vmul.f32 %v950, %v991
        %v1015 = vmul.f32 %v951, %v993
        %v1016 = vmul.f32 %v952, %v995
        %v1017 = vmul.f32 %v953, %v997
        %v1018 = vmul.f32 %v954, %v999
        %v1019 = vmul.f32 %v955, %v1001
        %v1020 = vmul.f32 %v956, %v1003
        %v1021 = vmul.f32 %v957, %v1005
        %v1022 = vadd.f32 %v736, %v1006
        %v1023 = vadd.f32 %v740, %v1007
        %v1024 = vadd.f32 %v746, %v1008
        %v1025 = vadd.f32 %v750, %v1009
        %v1026 = vadd.f32 %v756, %v1010
        %v1027 = vadd.f32 %v760, %v1011
        %v1028 = vadd.f32 %v766, %v1012
        %v1029 = vadd.f32 %v770, %v1013
        %v1030 = vadd.f32 %v776, %v1014
        %v1031 = vadd.f32 %v780, %v1015
        %v1032 = vadd.f32 %v786, %v1016
        %v1033 = vadd.f32 %v790, %v1017
        %v1034 = vadd.f32 %v796, %v1018
        %v1035 = vadd.f32 %v800, %v1019
        %v1036 = vadd.f32 %v806, %v1020
        %v1037 = vadd.f32 %v810, %v1021
        %v1038 = vpack.c.bf16 %v1023, %v1022
        %v1039 = vpack.c.bf16 %v1025, %v1024
        %v1040 = vpack.c.bf16 %v1027, %v1026
        %v1041 = vpack.c.bf16 %v1029, %v1028
        %v1042 = vpack.c.bf16 %v1031, %v1030
        %v1043 = vpack.c.bf16 %v1033, %v1032
        %v1044 = vpack.c.bf16 %v1035, %v1034
        %v1045 = vpack.c.bf16 %v1037, %v1036
        %v1046 = vld [vmem:[%s6] sm:$0xf]
        %v1047 = vld [vmem:[%s6 + $0x4] sm:$0xf]
        %v1048 = vld [vmem:[%s7] sm:$0x1]
        %v1050 = vlaneseq
        %v1051 = vshrl.u32 %v1050, 7
        %v1052 = vsub.s32 0, %v1051
        %v1053 = vrot.slane %v1048, %v1052
        %v1057 = vunpack.c.l.b16 %v1046
        %v1058 = vunpack.c.l.b16 %v1047
        %v1059 = vpack.c.b16 %v1058, %v1057
        %vm1061 = vcmask 130048
        %v1063 = vsel %vm1061, %v1038, 0
        %v1066 = vsel %vm1061, %v1039, 0
        %v1069 = vsel %vm1061, %v1040, 0
        %v1072 = vsel %vm1061, %v1041, 0
        %v1075 = vsel %vm1061, %v1042, 0
        %v1078 = vsel %vm1061, %v1043, 0
        %v1081 = vsel %vm1061, %v1044, 0
        %v1084 = vsel %vm1061, %v1045, 0
        %1086 = vmatprep.subr.bf16.mxu0 0
        %1087 = vmatpush1.bf16.msra.mxu0 0
        %1088 = vmatprep.subr.bf16.mxu0 0
        %1089 = vmatpush1.bf16.msra.mxu0 0
        %1090 = vmatprep.subr.bf16.mxu0 0
        %1091 = vmatpush1.bf16.msra.mxu0 0
        %1092 = vmatprep.subr.bf16.mxu0 0
        %1093 = vmatpush1.bf16.msra.mxu0 0
        %1094 = vmatprep.subr.bf16.mxu0 0
        %1095 = vmatpush1.bf16.msra.mxu0 0
        %1096 = vmatprep.subr.bf16.mxu0 0
        %1097 = vmatpush1.bf16.msra.mxu0 0
        %1098 = vmatprep.subr.bf16.mxu0 0
        %1099 = vmatpush1.bf16.msra.mxu0 0
        %1100 = vmatprep.subr.bf16.mxu0 0
        %1101 = vmatpush1.bf16.msra.mxu0 %v1059
        %1102 = vmatprep.subr.bf16.mxu0 0
        %1103 = vmatpush2.bf16.msra.mxu0 0
        %1104 = vmatprep.subr.bf16.mxu0 0
        %1105 = vmatpush2.bf16.msra.mxu0 0
        %1106 = vmatprep.subr.bf16.mxu0 0
        %1107 = vmatpush2.bf16.msra.mxu0 0
        %1108 = vmatprep.subr.bf16.mxu0 0
        %1109 = vmatpush2.bf16.msra.mxu0 0
        %1110 = vmatprep.subr.bf16.mxu0 0
        %1111 = vmatpush2.bf16.msra.mxu0 0
        %1112 = vmatprep.subr.bf16.mxu0 0
        %1113 = vmatpush2.bf16.msra.mxu0 0
        %1114 = vmatprep.subr.bf16.mxu0 0
        %1115 = vmatpush2.bf16.msra.mxu0 0
        %1116 = vmatprep.subr.bf16.mxu0 0
        %1117 = vmatpush2.bf16.msra.mxu0 0
        %1118 = vmatprep.mubr.bf16.mxu0 0
        %1119 = vmatmul.mubr.bf16.gmra.mxu0 %v1063
        %v1120 = vpop.f32.mrf.mxu0
        %v1121 = vadd.f32 %v1053, %v1120
        %v1122 = vpop.f32.mrf.mxu0
        %v1123 = vpop.f32.mrf.mxu0
        %v1124 = vadd.f32 %v1053, %v1123
        %v1125 = vpop.f32.mrf.mxu0
        %1126 = vmatprep.mubr.bf16.mxu0 0
        %1127 = vmatmul.mubr.bf16.gmra.mxu0 %v1066
        %v1128 = vpop.f32.mrf.mxu0
        %v1129 = vadd.f32 %v1053, %v1128
        %v1130 = vpop.f32.mrf.mxu0
        %v1131 = vpop.f32.mrf.mxu0
        %v1132 = vadd.f32 %v1053, %v1131
        %v1133 = vpop.f32.mrf.mxu0
        %1134 = vmatprep.mubr.bf16.mxu0 0
        %1135 = vmatmul.mubr.bf16.gmra.mxu0 %v1069
        %v1136 = vpop.f32.mrf.mxu0
        %v1137 = vadd.f32 %v1053, %v1136
        %v1138 = vpop.f32.mrf.mxu0
        %v1139 = vpop.f32.mrf.mxu0
        %v1140 = vadd.f32 %v1053, %v1139
        %v1141 = vpop.f32.mrf.mxu0
        %1142 = vmatprep.mubr.bf16.mxu0 0
        %1143 = vmatmul.mubr.bf16.gmra.mxu0 %v1072
        %v1144 = vpop.f32.mrf.mxu0
        %v1145 = vadd.f32 %v1053, %v1144
        %v1146 = vpop.f32.mrf.mxu0
        %v1147 = vpop.f32.mrf.mxu0
        %v1148 = vadd.f32 %v1053, %v1147
        %v1149 = vpop.f32.mrf.mxu0
        %1150 = vmatprep.mubr.bf16.mxu0 0
        %1151 = vmatmul.mubr.bf16.gmra.mxu0 %v1075
        %v1152 = vpop.f32.mrf.mxu0
        %v1153 = vadd.f32 %v1053, %v1152
        %v1154 = vpop.f32.mrf.mxu0
        %v1155 = vpop.f32.mrf.mxu0
        %v1156 = vadd.f32 %v1053, %v1155
        %v1157 = vpop.f32.mrf.mxu0
        %1158 = vmatprep.mubr.bf16.mxu0 0
        %1159 = vmatmul.mubr.bf16.gmra.mxu0 %v1078
        %v1160 = vpop.f32.mrf.mxu0
        %v1161 = vadd.f32 %v1053, %v1160
        %v1162 = vpop.f32.mrf.mxu0
        %v1163 = vpop.f32.mrf.mxu0
        %v1164 = vadd.f32 %v1053, %v1163
        %v1165 = vpop.f32.mrf.mxu0
        %1166 = vmatprep.mubr.bf16.mxu0 0
        %1167 = vmatmul.mubr.bf16.gmra.mxu0 %v1081
        %v1168 = vpop.f32.mrf.mxu0
        %v1169 = vadd.f32 %v1053, %v1168
        %v1170 = vpop.f32.mrf.mxu0
        %v1171 = vpop.f32.mrf.mxu0
        %v1172 = vadd.f32 %v1053, %v1171
        %v1173 = vpop.f32.mrf.mxu0
        %1174 = vmatprep.mubr.bf16.mxu0 0
        %1175 = vmatmul.mubr.bf16.gmra.mxu0 %v1084
        %v1176 = vpop.f32.mrf.mxu0
        %v1177 = vadd.f32 %v1053, %v1176
        %v1178 = vpop.f32.mrf.mxu0
        %v1179 = vpop.f32.mrf.mxu0
        %v1180 = vadd.f32 %v1053, %v1179
        %v1181 = vpop.f32.mrf.mxu0
        %1182 = vdwg.mxu0
        %v1183 = vmax.f32 %v1121, 0.0
        %v1184 = vmax.f32 %v1124, 0.0
        %v1185 = vmax.f32 %v1129, 0.0
        %v1186 = vmax.f32 %v1132, 0.0
        %v1187 = vmax.f32 %v1137, 0.0
        %v1188 = vmax.f32 %v1140, 0.0
        %v1189 = vmax.f32 %v1145, 0.0
        %v1190 = vmax.f32 %v1148, 0.0
        %v1191 = vmax.f32 %v1153, 0.0
        %v1192 = vmax.f32 %v1156, 0.0
        %v1193 = vmax.f32 %v1161, 0.0
        %v1194 = vmax.f32 %v1164, 0.0
        %v1195 = vmax.f32 %v1169, 0.0
        %v1196 = vmax.f32 %v1172, 0.0
        %v1197 = vmax.f32 %v1177, 0.0
        %v1198 = vmax.f32 %v1180, 0.0
        %v1199 = vpack.c.bf16 %v1184, %v1183
        %v1200 = vpack.c.bf16 %v1186, %v1185
        %v1201 = vpack.c.bf16 %v1188, %v1187
        %v1202 = vpack.c.bf16 %v1190, %v1189
        %v1203 = vpack.c.bf16 %v1192, %v1191
        %v1204 = vpack.c.bf16 %v1194, %v1193
        %v1205 = vpack.c.bf16 %v1196, %v1195
        %v1206 = vpack.c.bf16 %v1198, %v1197
        %v1207 = vld [vmem:[%s8] sm:$0xf]
        %v1208 = vld [vmem:[%s8 + $0x4] sm:$0xf]
        %v1209 = vld [vmem:[%s8 + $0x8] sm:$0xf]
        %v1210 = vld [vmem:[%s8 + $0xc] sm:$0xf]
        %v1211 = vld [vmem:[%s8 + $0x10] sm:$0xf]
        %v1212 = vld [vmem:[%s8 + $0x14] sm:$0xf]
        %v1213 = vld [vmem:[%s8 + $0x18] sm:$0xf]
        %v1214 = vld [vmem:[%s8 + $0x1c] sm:$0xf]
        %v1215 = vld [vmem:[%s8 + $0x20] sm:$0xf]
        %v1216 = vld [vmem:[%s8 + $0x24] sm:$0xf]
        %v1217 = vld [vmem:[%s8 + $0x28] sm:$0xf]
        %v1218 = vld [vmem:[%s8 + $0x2c] sm:$0xf]
        %v1219 = vld [vmem:[%s8 + $0x30] sm:$0xf]
        %v1220 = vld [vmem:[%s8 + $0x34] sm:$0xf]
        %v1221 = vld [vmem:[%s8 + $0x38] sm:$0xf]
        %v1222 = vld [vmem:[%s8 + $0x3c] sm:$0xf]
        %v1223 = vld [vmem:[%s9] sm:$0x1]
        %v1225 = vlaneseq
        %v1226 = vshrl.u32 %v1225, 7
        %v1227 = vsub.s32 0, %v1226
        %v1228 = vrot.slane %v1223, %v1227
        %v1246 = vunpack.c.l.b16 %v1207
        %v1247 = vunpack.c.l.b16 %v1208
        %v1248 = vunpack.c.l.b16 %v1209
        %v1249 = vunpack.c.l.b16 %v1210
        %v1250 = vunpack.c.l.b16 %v1211
        %v1251 = vunpack.c.l.b16 %v1212
        %v1252 = vunpack.c.l.b16 %v1213
        %v1253 = vunpack.c.l.b16 %v1214
        %v1254 = vunpack.c.l.b16 %v1215
        %v1255 = vunpack.c.l.b16 %v1216
        %v1256 = vunpack.c.l.b16 %v1217
        %v1257 = vunpack.c.l.b16 %v1218
        %v1258 = vunpack.c.l.b16 %v1219
        %v1259 = vunpack.c.l.b16 %v1220
        %v1260 = vunpack.c.l.b16 %v1221
        %v1261 = vunpack.c.l.b16 %v1222
        %v1262 = vpack.c.b16 %v1247, %v1246
        %v1263 = vpack.c.b16 %v1249, %v1248
        %v1264 = vpack.c.b16 %v1251, %v1250
        %v1265 = vpack.c.b16 %v1253, %v1252
        %v1266 = vpack.c.b16 %v1255, %v1254
        %v1267 = vpack.c.b16 %v1257, %v1256
        %v1268 = vpack.c.b16 %v1259, %v1258
        %v1269 = vpack.c.b16 %v1261, %v1260
        %1278 = vmatprep.subr.bf16.mxu0 0
        %1279 = vmatpush1.bf16.msra.mxu0 %v1269
        %1280 = vmatprep.subr.bf16.mxu0 0
        %1281 = vmatpush1.bf16.msra.mxu0 %v1268
        %1282 = vmatprep.subr.bf16.mxu0 0
        %1283 = vmatpush1.bf16.msra.mxu0 %v1267
        %1284 = vmatprep.subr.bf16.mxu0 0
        %1285 = vmatpush1.bf16.msra.mxu0 %v1266
        %1286 = vmatprep.subr.bf16.mxu0 0
        %1287 = vmatpush1.bf16.msra.mxu0 %v1265
        %1288 = vmatprep.subr.bf16.mxu0 0
        %1289 = vmatpush1.bf16.msra.mxu0 %v1264
        %1290 = vmatprep.subr.bf16.mxu0 0
        %1291 = vmatpush1.bf16.msra.mxu0 %v1263
        %1292 = vmatprep.subr.bf16.mxu0 0
        %1293 = vmatpush1.bf16.msra.mxu0 %v1262
        %1294 = vmatprep.subr.bf16.mxu0 0
        %1295 = vmatpush2.bf16.msra.mxu0 0
        %1296 = vmatprep.subr.bf16.mxu0 0
        %1297 = vmatpush2.bf16.msra.mxu0 0
        %1298 = vmatprep.subr.bf16.mxu0 0
        %1299 = vmatpush2.bf16.msra.mxu0 0
        %1300 = vmatprep.subr.bf16.mxu0 0
        %1301 = vmatpush2.bf16.msra.mxu0 0
        %1302 = vmatprep.subr.bf16.mxu0 0
        %1303 = vmatpush2.bf16.msra.mxu0 0
        %1304 = vmatprep.subr.bf16.mxu0 0
        %1305 = vmatpush2.bf16.msra.mxu0 0
        %1306 = vmatprep.subr.bf16.mxu0 0
        %1307 = vmatpush2.bf16.msra.mxu0 0
        %1308 = vmatprep.subr.bf16.mxu0 0
        %1309 = vmatpush2.bf16.msra.mxu0 0
        %1310 = vmatprep.mubr.bf16.mxu0 0
        %1311 = vmatmul.mubr.bf16.gmra.mxu0 %v1199
        %v1312 = vpop.f32.mrf.mxu0
        %v1313 = vadd.f32 %v1228, %v1312
        %v1314 = vpop.f32.mrf.mxu0
        %v1315 = vpop.f32.mrf.mxu0
        %v1316 = vadd.f32 %v1228, %v1315
        %v1317 = vpop.f32.mrf.mxu0
        %1318 = vmatprep.mubr.bf16.mxu0 0
        %1319 = vmatmul.mubr.bf16.gmra.mxu0 %v1200
        %v1320 = vpop.f32.mrf.mxu0
        %v1321 = vadd.f32 %v1228, %v1320
        %v1322 = vpop.f32.mrf.mxu0
        %v1323 = vpop.f32.mrf.mxu0
        %v1324 = vadd.f32 %v1228, %v1323
        %v1325 = vpop.f32.mrf.mxu0
        %1326 = vmatprep.mubr.bf16.mxu0 0
        %1327 = vmatmul.mubr.bf16.gmra.mxu0 %v1201
        %v1328 = vpop.f32.mrf.mxu0
        %v1329 = vadd.f32 %v1228, %v1328
        %v1330 = vpop.f32.mrf.mxu0
        %v1331 = vpop.f32.mrf.mxu0
        %v1332 = vadd.f32 %v1228, %v1331
        %v1333 = vpop.f32.mrf.mxu0
        %1334 = vmatprep.mubr.bf16.mxu0 0
        %1335 = vmatmul.mubr.bf16.gmra.mxu0 %v1202
        %v1336 = vpop.f32.mrf.mxu0
        %v1337 = vadd.f32 %v1228, %v1336
        %v1338 = vpop.f32.mrf.mxu0
        %v1339 = vpop.f32.mrf.mxu0
        %v1340 = vadd.f32 %v1228, %v1339
        %v1341 = vpop.f32.mrf.mxu0
        %1342 = vmatprep.mubr.bf16.mxu0 0
        %1343 = vmatmul.mubr.bf16.gmra.mxu0 %v1203
        %v1344 = vpop.f32.mrf.mxu0
        %v1345 = vadd.f32 %v1228, %v1344
        %v1346 = vpop.f32.mrf.mxu0
        %v1347 = vpop.f32.mrf.mxu0
        %v1348 = vadd.f32 %v1228, %v1347
        %v1349 = vpop.f32.mrf.mxu0
        %1350 = vmatprep.mubr.bf16.mxu0 0
        %1351 = vmatmul.mubr.bf16.gmra.mxu0 %v1204
        %v1352 = vpop.f32.mrf.mxu0
        %v1353 = vadd.f32 %v1228, %v1352
        %v1354 = vpop.f32.mrf.mxu0
        %v1355 = vpop.f32.mrf.mxu0
        %v1356 = vadd.f32 %v1228, %v1355
        %v1357 = vpop.f32.mrf.mxu0
        %1358 = vmatprep.mubr.bf16.mxu0 0
        %1359 = vmatmul.mubr.bf16.gmra.mxu0 %v1205
        %v1360 = vpop.f32.mrf.mxu0
        %v1361 = vadd.f32 %v1228, %v1360
        %v1362 = vpop.f32.mrf.mxu0
        %v1363 = vpop.f32.mrf.mxu0
        %v1364 = vadd.f32 %v1228, %v1363
        %v1365 = vpop.f32.mrf.mxu0
        %1366 = vmatprep.mubr.bf16.mxu0 0
        %1367 = vmatmul.mubr.bf16.gmra.mxu0 %v1206
        %v1368 = vpop.f32.mrf.mxu0
        %v1369 = vadd.f32 %v1228, %v1368
        %v1370 = vpop.f32.mrf.mxu0
        %v1371 = vpop.f32.mrf.mxu0
        %v1372 = vadd.f32 %v1228, %v1371
        %v1373 = vpop.f32.mrf.mxu0
        %1374 = vdwg.mxu0
        %v1375 = vpack.c.bf16 %v1316, %v1313
        %v1376 = vpack.c.bf16 %v1324, %v1321
        %v1377 = vpack.c.bf16 %v1332, %v1329
        %v1378 = vpack.c.bf16 %v1340, %v1337
        %v1379 = vpack.c.bf16 %v1348, %v1345
        %v1380 = vpack.c.bf16 %v1356, %v1353
        %v1381 = vpack.c.bf16 %v1364, %v1361
        %v1382 = vpack.c.bf16 %v1372, %v1369
        %v1391 = vunpack.c.l.b16 %v1375
        %v1392 = vunpack.c.h.b16 %v1375
        %v1393 = vunpack.c.l.b16 %v1376
        %v1394 = vunpack.c.h.b16 %v1376
        %v1395 = vunpack.c.l.b16 %v1377
        %v1396 = vunpack.c.h.b16 %v1377
        %v1397 = vunpack.c.l.b16 %v1378
        %v1398 = vunpack.c.h.b16 %v1378
        %v1399 = vunpack.c.l.b16 %v1379
        %v1400 = vunpack.c.h.b16 %v1379
        %v1401 = vunpack.c.l.b16 %v1380
        %v1402 = vunpack.c.h.b16 %v1380
        %v1403 = vunpack.c.l.b16 %v1381
        %v1404 = vunpack.c.h.b16 %v1381
        %v1405 = vunpack.c.l.b16 %v1382
        %v1406 = vunpack.c.h.b16 %v1382
        %v1407 = vpack.c.b16 %v1391, %v1391
        %v1408 = vpack.c.b16 %v1392, %v1392
        %v1409 = vpack.c.b16 %v1393, %v1393
        %v1410 = vpack.c.b16 %v1394, %v1394
        %v1411 = vpack.c.b16 %v1395, %v1395
        %v1412 = vpack.c.b16 %v1396, %v1396
        %v1413 = vpack.c.b16 %v1397, %v1397
        %v1414 = vpack.c.b16 %v1398, %v1398
        %v1415 = vpack.c.b16 %v1399, %v1399
        %v1416 = vpack.c.b16 %v1400, %v1400
        %v1417 = vpack.c.b16 %v1401, %v1401
        %v1418 = vpack.c.b16 %v1402, %v1402
        %v1419 = vpack.c.b16 %v1403, %v1403
        %v1420 = vpack.c.b16 %v1404, %v1404
        %v1421 = vpack.c.b16 %v1405, %v1405
        %v1422 = vpack.c.b16 %v1406, %v1406
        %1439 = vst [vmem:[%s369] sm:$0xf] %v1407
        %1440 = vst [vmem:[%s369 + $0xc] sm:$0xf] %v1408
        %1441 = vst [vmem:[%s369 + $0x18] sm:$0xf] %v1409
        %1442 = vst [vmem:[%s369 + $0x24] sm:$0xf] %v1410
        %1443 = vst [vmem:[%s369 + $0x30] sm:$0xf] %v1411
        %1444 = vst [vmem:[%s369 + $0x3c] sm:$0xf] %v1412
        %1445 = vst [vmem:[%s369 + $0x48] sm:$0xf] %v1413
        %1446 = vst [vmem:[%s369 + $0x54] sm:$0xf] %v1414
        %1447 = vst [vmem:[%s369 + $0x60] sm:$0xf] %v1415
        %1448 = vst [vmem:[%s369 + $0x6c] sm:$0xf] %v1416
        %1449 = vst [vmem:[%s369 + $0x78] sm:$0xf] %v1417
        %1450 = vst [vmem:[%s369 + $0x84] sm:$0xf] %v1418
        %1451 = vst [vmem:[%s369 + $0x90] sm:$0xf] %v1419
        %1452 = vst [vmem:[%s369 + $0x9c] sm:$0xf] %v1420
        %1453 = vst [vmem:[%s369 + $0xa8] sm:$0xf] %v1421
        %1454 = vst [vmem:[%s369 + $0xb4] sm:$0xf] %v1422
        %s1455 = sand.u32 %s252, 1
        %s1456 = scalar_lea.sflag [#allocation3], %s1455
        %s1457 = sand.u32 %s252, 1
        %s1458 = smul.addr %s1457, 192
        %s1459 = scalar_lea.vmem [#allocation2], %s1458
        // Predicated region
        $region61: #{tpu_custom_call.1} parent=59 // pred_check
          %p1460 = pneg %p262
        $region62: #{tpu_custom_call.1} parent=59 // pred_check_branch
          %1462 = sbr.rel (%p1460) target = $region64
        $region63: #{tpu_custom_call.1} parent=59 // pred_region
          %s1463 = smul.u32 16, %s24
          %s1465 = ssub.s32 3072, 3072
          %1466 = vsyncadd %s1456, %s1465
          %s1467 = smul.addr %s1463, 3
          %s1468 = smul.addr %s1467, 64
          %s1469 = scalar_lea.hbm %s10, %s1468
          %s1470 = sshll.u32 %s1459, 4
          %s1471 = int_to_ptr.vmem [resolvable:$true] %s1470
          %1476 = dma.vmem_to_hbm [thread:$0]  %s1471, 3072, %s1469, %s1456, 192, 192, 12
        $region64: #{tpu_custom_call.1} parent=59 // pred_fallthru
          _
      $region60: #{tpu_custom_call.1} parent=5 // pred_fallthru
        _
      %p1477 = scmp.le.s32.totalorder 2, %s19
      // Predicated region
      $region65: #{tpu_custom_call.1} parent=5 // pred_check
        %p1478 = pneg %p1477
      $region66: #{tpu_custom_call.1} parent=5 // pred_check_branch
        %1480 = sbr.rel (%p1478) target = $region68
      $region67: #{tpu_custom_call.1} parent=5 // pred_region
        %s1481 = ssub.s32 %s19, 2
        // Predicated region
        $region69: #{tpu_custom_call.1} parent=67 // pred_check
          %p1482 = pneg %p268
        $region70: #{tpu_custom_call.1} parent=67 // pred_check_branch
          %1484 = sbr.rel (%p1482) target = $region72
        $region71: #{tpu_custom_call.1} parent=67 // pred_region
          %s1485 = sand.u32 %s253, 1
          %s1486 = scalar_lea.sflag [#allocation3], %s1485
          %s1487 = sand.u32 %s253, 1
          %s1488 = smul.addr %s1487, 192
          %s1489 = scalar_lea.vmem [#allocation2], %s1488
          %1490 = dma.done %s1486, 3072
        $region72: #{tpu_custom_call.1} parent=67 // pred_fallthru
          _
      $region68: #{tpu_custom_call.1} parent=5 // pred_fallthru
        _
    $region6: #{tpu_custom_call.1} parent=1 // loop_footer
      %s23 = sadd.s32 1, %s19
    $region7: #{tpu_custom_call.1} parent=1 // loop_footer_branch
      %18 = sbr.rel target = $region3
    $region8: #{tpu_custom_call.1} parent=1 // loop_exit
      _
    %1491 = vsyncpa [#allocation3], 1
    %s1492 = scalar_lea.sflag [#allocation3], 1
    %1493 = vsyncpa %s1492, 1

</llo_original>
